<compile_context>
chip_gen: v6e
topology: v6e:2x2x1
jax: 0.10.0
libtpu: 0.0.40
codegen_flags: <defaults>
</compile_context>

<pallas_src>
import functools
import math

import jax
import jax.numpy as jnp
from jax import lax
from jax.experimental import pallas as pl
from jax.experimental.pallas import tpu as pltpu


_COMPUTE_DTYPE = jnp.bfloat16   # MXU operand dtype (accumulation stays f32)
_UNROLL_T = 64                  # fully unroll the recurrence up to this length
_FORI_UNROLL = 4                # partial unroll for the long-T fori_loop path


# ----------------------------------------------------------------------------
# Helpers
# ----------------------------------------------------------------------------
def _round_up(x, m):
    return (x + m - 1) // m * m


def _full_block(shape):
    zeros = (0,) * len(shape)
    return pl.BlockSpec(shape, lambda: zeros)


# ----------------------------------------------------------------------------
# Fused kernel: all RNN layers + FC head in one pallas_call
# ----------------------------------------------------------------------------
def _make_fused_rnn_kernel(num_layers, T, time_chunk):
    n_w = 3 * num_layers

    def kernel(*refs):
        x_ref = refs[0]                    # (T, B_pad, D)   bf16, time-major
        layer_refs = refs[1:1 + n_w]       # per layer: W_ih^T bf16, W_hh^T bf16, bias f32
        wfc_ref = refs[1 + n_w]            # (H_pad, O_pad)  bf16
        bfc_ref = refs[2 + n_w]            # (1, O_pad)      f32
        out_ref = refs[3 + n_w]            # (B_pad, O_pad)  f32
        buf_ref = refs[4 + n_w]            # scratch (T, B_pad, H_pad) bf16

        B = x_ref.shape[1]
        H = buf_ref.shape[2]

        h = None
        for l in range(num_layers):
            last_layer = (l == num_layers - 1)
            w_ih = layer_refs[3 * l][...]        # (d_in, H_pad) bf16
            w_hh = layer_refs[3 * l + 1][...]    # (H_pad, H_pad) bf16 — hoisted,
            b = layer_refs[3 * l + 2][...]       # (1, H_pad) f32      resident all steps

            # Hoisted input projection for ALL timesteps, time-chunked so the
            # whole hidden sequence is never live in vregs at once.  Each chunk
            # is read before its slot is overwritten (in-place, safe).
            for t0 in range(0, T, time_chunk):
                tc = min(time_chunk, T - t0)
                chunk = (x_ref if l == 0 else buf_ref)[pl.ds(t0, tc)]
                d_in = chunk.shape[-1]
                proj = jnp.dot(chunk.reshape(tc * B, d_in), w_ih,
                               preferred_element_type=jnp.float32)
                proj = proj + b                       # fused b_ih + b_hh (f32)
                buf_ref[pl.ds(t0, tc)] = (
                    proj.reshape(tc, B, H).astype(buf_ref.dtype))

            # Serial recurrence: only h @ W_hh (bf16 MXU, f32 acc) + tanh (f32)
            # remain on the critical path.
            def step(t, h_prev, _w_hh=w_hh, _last=last_layer):
                pre = buf_ref[t].astype(jnp.float32) + jnp.dot(
                    h_prev, _w_hh, preferred_element_type=jnp.float32)
                h_new = jnp.tanh(pre).astype(_COMPUTE_DTYPE)
                if not _last:
                    buf_ref[t] = h_new   # hidden sequence feeds the next layer
                return h_new

            # t = 0: h0 == 0, so the h@W_hh matmul vanishes entirely.
            h = jnp.tanh(buf_ref[0].astype(jnp.float32)).astype(_COMPUTE_DTYPE)
            if not last_layer:
                buf_ref[0] = h

            if T <= _UNROLL_T:
                for t in range(1, T):        # fully unrolled: max LLO visibility
                    h = step(t, h)
            elif T > 1:
                h = lax.fori_loop(1, T, step, h, unroll=_FORI_UNROLL)

        # FC head fused into the same kernel (lane-dense padded f32 output).
        out_ref[...] = (
            jnp.dot(h, wfc_ref[...], preferred_element_type=jnp.float32)
            + bfc_ref[...]
        )

    return kernel


# ----------------------------------------------------------------------------
# Wrapper
# ----------------------------------------------------------------------------
@functools.partial(jax.jit, static_argnums=(4,))
def rnn_model_forward(x, rnn_layers, w_fc_t, b_fc, output_dim):
    """x: (B, T, input_dim) batch-first float32.  rnn_layers: tuple of padded
    (w_ih_t, w_hh_t, b) per layer.  Returns (B, output_dim) float32."""
    B, T, D = x.shape
    B_pad = _round_up(B, 16)        # bf16 sublane packing = 16 rows
    H_pad = w_fc_t.shape[0]
    O_pad = w_fc_t.shape[1]
    num_layers = len(rnn_layers)

    # Time-major, pad batch only (feature dim stays at natural D), cast to
    # bf16.  Transpose + pad + cast fuse into one pass over x in XLA.
    x_tm = jnp.transpose(x, (1, 0, 2))
    x_tm = jnp.pad(x_tm, ((0, 0), (0, B_pad - B), (0, 0))).astype(_COMPUTE_DTYPE)

    flat_inputs = [x_tm]
    in_specs = [_full_block((T, B_pad, D))]
    for (w_ih, w_hh, b) in rnn_layers:
        flat_inputs += [w_ih, w_hh, b]
        in_specs += [_full_block(w_ih.shape),
                     _full_block(w_hh.shape),
                     _full_block(b.shape)]
    flat_inputs += [w_fc_t, b_fc]
    in_specs += [_full_block(w_fc_t.shape), _full_block(b_fc.shape)]

    # Time chunk for the hoisted projection: bound rows per chunk (~256) so
    # vreg pressure stays low and load->dot->store can pipeline.
    time_chunk = max(1, min(T, 256 // B_pad))

    # VMEM budget from the actual footprint (inputs + output + scratch) with
    # 2x headroom; capped at 56 MiB so the same kernel fits v7x's 64 MiB.
    footprint = sum(math.prod(a.shape) * a.dtype.itemsize for a in flat_inputs)
    footprint += B_pad * O_pad * 4                                   # output
    footprint += T * B_pad * H_pad * jnp.dtype(_COMPUTE_DTYPE).itemsize  # scratch
    vmem_limit = int(min(max(2 * footprint + (2 << 20), 16 << 20), 56 << 20))

    out_pad = pl.pallas_call(
        _make_fused_rnn_kernel(num_layers, T, time_chunk),
        out_shape=jax.ShapeDtypeStruct((B_pad, O_pad), jnp.float32),
        in_specs=in_specs,
        out_specs=_full_block((B_pad, O_pad)),
        scratch_shapes=[pltpu.VMEM((T, B_pad, H_pad), _COMPUTE_DTYPE)],
        compiler_params=pltpu.CompilerParams(vmem_limit_bytes=vmem_limit),
    )(*flat_inputs)
    return out_pad[:B, :output_dim]


# ----------------------------------------------------------------------------
# Parameter init (PyTorch-style uniform(-1/sqrt(H), 1/sqrt(H))) and padding
# ----------------------------------------------------------------------------
def init_params(key, input_dim, hidden_dim, output_dim, num_layers):
    bound = 1.0 / jnp.sqrt(jnp.float32(hidden_dim))
    layers = []
    for l in range(num_layers):
        d_in = input_dim if l == 0 else hidden_dim
        key, k1, k2, k3, k4 = jax.random.split(key, 5)
        w_ih = jax.random.uniform(k1, (hidden_dim, d_in), jnp.float32, -bound, bound)
        w_hh = jax.random.uniform(k2, (hidden_dim, hidden_dim), jnp.float32, -bound, bound)
        b_ih = jax.random.uniform(k3, (hidden_dim,), jnp.float32, -bound, bound)
        b_hh = jax.random.uniform(k4, (hidden_dim,), jnp.float32, -bound, bound)
        layers.append({
            "w_ih_t": w_ih.T,                          # (d_in, H)
            "w_hh_t": w_hh.T,                          # (H, H)
            "b": (b_ih + b_hh).reshape(1, hidden_dim), # fused bias
        })
    key, k5, k6 = jax.random.split(key, 3)
    w_fc = jax.random.uniform(k5, (output_dim, hidden_dim), jnp.float32, -bound, bound)
    b_fc = jax.random.uniform(k6, (output_dim,), jnp.float32, -bound, bound)
    return {
        "rnn_layers": layers,
        "fc_w_t": w_fc.T,                       # (H, O)
        "fc_b": b_fc.reshape(1, output_dim),    # (1, O)
    }


def pad_params(params, input_dim, hidden_dim, output_dim):
    """Zero-pad hidden/output lanes to 128 (padded lanes stay exactly 0); cast
    matmul operands to bf16, keep biases f32.  x's feature dim is NOT padded."""
    H_pad = _round_up(hidden_dim, 128)
    O_pad = _round_up(output_dim, 128)
    layers = []
    for l, layer in enumerate(params["rnn_layers"]):
        d_in = input_dim if l == 0 else hidden_dim
        d_in_pad = input_dim if l == 0 else H_pad
        w_ih = (jnp.zeros((d_in_pad, H_pad), jnp.float32)
                .at[:d_in, :hidden_dim].set(layer["w_ih_t"])).astype(_COMPUTE_DTYPE)
        w_hh = (jnp.zeros((H_pad, H_pad), jnp.float32)
                .at[:hidden_dim, :hidden_dim].set(layer["w_hh_t"])).astype(_COMPUTE_DTYPE)
        b = (jnp.zeros((1, H_pad), jnp.float32)
             .at[:, :hidden_dim].set(layer["b"]))
        layers.append((w_ih, w_hh, b))
    w_fc = (jnp.zeros((H_pad, O_pad), jnp.float32)
            .at[:hidden_dim, :output_dim].set(params["fc_w_t"])).astype(_COMPUTE_DTYPE)
    b_fc = (jnp.zeros((1, O_pad), jnp.float32)
            .at[:, :output_dim].set(params["fc_b"]))
    return tuple(layers), w_fc, b_fc


# ----------------------------------------------------------------------------
# Pure-JAX reference (unpadded, f32) for correctness check
# ----------------------------------------------------------------------------
def reference_forward(x, params):
    B = x.shape[0]
    h_seq = jnp.transpose(x.astype(jnp.float32), (1, 0, 2))  # (T, B, D)
    for layer in params["rnn_layers"]:
        H = layer["w_hh_t"].shape[0]
        h = jnp.zeros((B, H), jnp.float32)
        outs = []
        for t in range(h_seq.shape[0]):
            h = jnp.tanh(h_seq[t] @ layer["w_ih_t"] + h @ layer["w_hh_t"] + layer["b"])
            outs.append(h)
        h_seq = jnp.stack(outs, axis=0)
    return h_seq[-1] @ params["fc_w_t"] + params["fc_b"]


if __name__ == "__main__":
    B, T = 2, 8
    input_dim, hidden_dim, output_dim, num_layers = 16, 32, 4, 2

    key = jax.random.PRNGKey(0)
    key, xk, pk = jax.random.split(key, 3)
    x = jax.random.normal(xk, (B, T, input_dim), jnp.float32)
    params = init_params(pk, input_dim, hidden_dim, output_dim, num_layers)
    rnn_layers_pad, w_fc_pad, b_fc_pad = pad_params(
        params, input_dim, hidden_dim, output_dim)

    y = rnn_model_forward(x, rnn_layers_pad, w_fc_pad, b_fc_pad, output_dim)
    y = jax.block_until_ready(y)

    y_ref = reference_forward(x, params)
    assert y.shape == (B, output_dim)
    # bf16 MXU operands (f32 accumulation) vs f32 reference -> loosened tolerance.
    max_err = float(jnp.max(jnp.abs(y - y_ref)))
    assert jnp.allclose(y, y_ref, atol=5e-2, rtol=5e-2), (
        f"mismatch vs reference (max abs err {max_err})")

    print("KERNEL_OK")
</pallas_src>

<mosaic_0001>
module attributes {stable_mosaic.version = 11 : i64} {
  func.func @kernel(%arg0: memref<8x16x16xbf16, #tpu.memory_space<vmem>>, %arg1: memref<16x128xbf16, #tpu.memory_space<vmem>>, %arg2: memref<128x128xbf16, #tpu.memory_space<vmem>>, %arg3: memref<1x128xf32, #tpu.memory_space<vmem>>, %arg4: memref<128x128xbf16, #tpu.memory_space<vmem>>, %arg5: memref<128x128xbf16, #tpu.memory_space<vmem>>, %arg6: memref<1x128xf32, #tpu.memory_space<vmem>>, %arg7: memref<128x128xbf16, #tpu.memory_space<vmem>>, %arg8: memref<1x128xf32, #tpu.memory_space<vmem>>, %arg9: memref<16x128xf32, #tpu.memory_space<vmem>>, %arg10: memref<8x16x128xbf16, #tpu.memory_space<vmem>>) attributes {dimension_semantics = [], scalar_prefetch = 0 : i64, scratch_operands = 1 : i64, tpu.core_type = #tpu.core_type<tc>} {
    %c0 = arith.constant 0 : index
    %c0_0 = arith.constant 0 : index
    %0 = vector.load %arg1[%c0, %c0_0] : memref<16x128xbf16, #tpu.memory_space<vmem>>, vector<16x128xbf16>
    %c0_1 = arith.constant 0 : index
    %c0_2 = arith.constant 0 : index
    %1 = vector.load %arg2[%c0_1, %c0_2] : memref<128x128xbf16, #tpu.memory_space<vmem>>, vector<128x128xbf16>
    %c0_3 = arith.constant 0 : index
    %c0_4 = arith.constant 0 : index
    %2 = vector.load %arg3[%c0_3, %c0_4] : memref<1x128xf32, #tpu.memory_space<vmem>>, vector<1x128xf32>
    %c0_5 = arith.constant 0 : index
    %c0_6 = arith.constant 0 : index
    %c0_7 = arith.constant 0 : index
    %3 = vector.load %arg0[%c0_5, %c0_6, %c0_7] : memref<8x16x16xbf16, #tpu.memory_space<vmem>>, vector<8x16x16xbf16>
    %4 = vector.shape_cast %3 : vector<8x16x16xbf16> to vector<128x16xbf16>
    %cst = arith.constant dense<0.000000e+00> : vector<128x128xf32>
    %5 = tpu.matmul %4, %0, %cst {dimension_numbers = #tpu.dot_dimension_numbers<[1], [0], [0], [1], [0, 0, 1, 1], [], []>} : vector<128x16xbf16>, vector<16x128xbf16>, vector<128x128xf32> -> vector<128x128xf32>
    %6 = vector.broadcast %2 : vector<1x128xf32> to vector<128x128xf32>
    %7 = arith.addf %5, %6 : vector<128x128xf32>
    %8 = vector.shape_cast %7 : vector<128x128xf32> to vector<8x16x128xf32>
    %9 = arith.truncf %8 : vector<8x16x128xf32> to vector<8x16x128xbf16>
    %c0_8 = arith.constant 0 : index
    %c0_9 = arith.constant 0 : index
    %c0_10 = arith.constant 0 : index
    %10 = vector.load %arg10[%c0_8, %c0_9, %c0_10] : memref<8x16x128xbf16, #tpu.memory_space<vmem>>, vector<8x16x128xbf16>
    tpu.vector_store %arg10[%c0_8, %c0_9, %c0_10], %9 {strides = array<i32>} : memref<8x16x128xbf16, #tpu.memory_space<vmem>>, vector<8x16x128xbf16>,
    %c0_11 = arith.constant 0 : index
    %c0_12 = arith.constant 0 : index
    %c0_13 = arith.constant 0 : index
    %11 = vector.load %arg10[%c0_11, %c0_12, %c0_13] : memref<8x16x128xbf16, #tpu.memory_space<vmem>>, vector<1x16x128xbf16>
    %12 = vector.shape_cast %11 : vector<1x16x128xbf16> to vector<16x128xbf16>
    %13 = arith.extf %12 : vector<16x128xbf16> to vector<16x128xf32>
    %14 = math.tanh %13 : vector<16x128xf32>
    %15 = arith.truncf %14 : vector<16x128xf32> to vector<16x128xbf16>
    %c0_14 = arith.constant 0 : index
    %c0_15 = arith.constant 0 : index
    %c0_16 = arith.constant 0 : index
    %16 = vector.load %arg10[%c0_14, %c0_15, %c0_16] : memref<8x16x128xbf16, #tpu.memory_space<vmem>>, vector<1x16x128xbf16>
    %17 = vector.shape_cast %16 : vector<1x16x128xbf16> to vector<16x128xbf16>
    %18 = vector.shape_cast %15 : vector<16x128xbf16> to vector<1x16x128xbf16>
    tpu.vector_store %arg10[%c0_14, %c0_15, %c0_16], %18 {strides = array<i32>} : memref<8x16x128xbf16, #tpu.memory_space<vmem>>, vector<1x16x128xbf16>,
    %c1 = arith.constant 1 : index
    %c0_17 = arith.constant 0 : index
    %c0_18 = arith.constant 0 : index
    %19 = vector.load %arg10[%c1, %c0_17, %c0_18] : memref<8x16x128xbf16, #tpu.memory_space<vmem>>, vector<1x16x128xbf16>
    %20 = vector.shape_cast %19 : vector<1x16x128xbf16> to vector<16x128xbf16>
    %21 = arith.extf %20 : vector<16x128xbf16> to vector<16x128xf32>
    %cst_19 = arith.constant dense<0.000000e+00> : vector<16x128xf32>
    %22 = tpu.matmul %15, %1, %cst_19 {dimension_numbers = #tpu.dot_dimension_numbers<[1], [0], [0], [1], [0, 0, 1, 1], [], []>} : vector<16x128xbf16>, vector<128x128xbf16>, vector<16x128xf32> -> vector<16x128xf32>
    %23 = arith.addf %21, %22 : vector<16x128xf32>
    %24 = math.tanh %23 : vector<16x128xf32>
    %25 = arith.truncf %24 : vector<16x128xf32> to vector<16x128xbf16>
    %c1_20 = arith.constant 1 : index
    %c0_21 = arith.constant 0 : index
    %c0_22 = arith.constant 0 : index
    %26 = vector.load %arg10[%c1_20, %c0_21, %c0_22] : memref<8x16x128xbf16, #tpu.memory_space<vmem>>, vector<1x16x128xbf16>
    %27 = vector.shape_cast %26 : vector<1x16x128xbf16> to vector<16x128xbf16>
    %28 = vector.shape_cast %25 : vector<16x128xbf16> to vector<1x16x128xbf16>
    tpu.vector_store %arg10[%c1_20, %c0_21, %c0_22], %28 {strides = array<i32>} : memref<8x16x128xbf16, #tpu.memory_space<vmem>>, vector<1x16x128xbf16>,
    %c2 = arith.constant 2 : index
    %c0_23 = arith.constant 0 : index
    %c0_24 = arith.constant 0 : index
    %29 = vector.load %arg10[%c2, %c0_23, %c0_24] : memref<8x16x128xbf16, #tpu.memory_space<vmem>>, vector<1x16x128xbf16>
    %30 = vector.shape_cast %29 : vector<1x16x128xbf16> to vector<16x128xbf16>
    %31 = arith.extf %30 : vector<16x128xbf16> to vector<16x128xf32>
    %cst_25 = arith.constant dense<0.000000e+00> : vector<16x128xf32>
    %32 = tpu.matmul %25, %1, %cst_25 {dimension_numbers = #tpu.dot_dimension_numbers<[1], [0], [0], [1], [0, 0, 1, 1], [], []>} : vector<16x128xbf16>, vector<128x128xbf16>, vector<16x128xf32> -> vector<16x128xf32>
    %33 = arith.addf %31, %32 : vector<16x128xf32>
    %34 = math.tanh %33 : vector<16x128xf32>
    %35 = arith.truncf %34 : vector<16x128xf32> to vector<16x128xbf16>
    %c2_26 = arith.constant 2 : index
    %c0_27 = arith.constant 0 : index
    %c0_28 = arith.constant 0 : index
    %36 = vector.load %arg10[%c2_26, %c0_27, %c0_28] : memref<8x16x128xbf16, #tpu.memory_space<vmem>>, vector<1x16x128xbf16>
    %37 = vector.shape_cast %36 : vector<1x16x128xbf16> to vector<16x128xbf16>
    %38 = vector.shape_cast %35 : vector<16x128xbf16> to vector<1x16x128xbf16>
    tpu.vector_store %arg10[%c2_26, %c0_27, %c0_28], %38 {strides = array<i32>} : memref<8x16x128xbf16, #tpu.memory_space<vmem>>, vector<1x16x128xbf16>,
    %c3 = arith.constant 3 : index
    %c0_29 = arith.constant 0 : index
    %c0_30 = arith.constant 0 : index
    %39 = vector.load %arg10[%c3, %c0_29, %c0_30] : memref<8x16x128xbf16, #tpu.memory_space<vmem>>, vector<1x16x128xbf16>
    %40 = vector.shape_cast %39 : vector<1x16x128xbf16> to vector<16x128xbf16>
    %41 = arith.extf %40 : vector<16x128xbf16> to vector<16x128xf32>
    %cst_31 = arith.constant dense<0.000000e+00> : vector<16x128xf32>
    %42 = tpu.matmul %35, %1, %cst_31 {dimension_numbers = #tpu.dot_dimension_numbers<[1], [0], [0], [1], [0, 0, 1, 1], [], []>} : vector<16x128xbf16>, vector<128x128xbf16>, vector<16x128xf32> -> vector<16x128xf32>
    %43 = arith.addf %41, %42 : vector<16x128xf32>
    %44 = math.tanh %43 : vector<16x128xf32>
    %45 = arith.truncf %44 : vector<16x128xf32> to vector<16x128xbf16>
    %c3_32 = arith.constant 3 : index
    %c0_33 = arith.constant 0 : index
    %c0_34 = arith.constant 0 : index
    %46 = vector.load %arg10[%c3_32, %c0_33, %c0_34] : memref<8x16x128xbf16, #tpu.memory_space<vmem>>, vector<1x16x128xbf16>
    %47 = vector.shape_cast %46 : vector<1x16x128xbf16> to vector<16x128xbf16>
    %48 = vector.shape_cast %45 : vector<16x128xbf16> to vector<1x16x128xbf16>
    tpu.vector_store %arg10[%c3_32, %c0_33, %c0_34], %48 {strides = array<i32>} : memref<8x16x128xbf16, #tpu.memory_space<vmem>>, vector<1x16x128xbf16>,
    %c4 = arith.constant 4 : index
    %c0_35 = arith.constant 0 : index
    %c0_36 = arith.constant 0 : index
    %49 = vector.load %arg10[%c4, %c0_35, %c0_36] : memref<8x16x128xbf16, #tpu.memory_space<vmem>>, vector<1x16x128xbf16>
    %50 = vector.shape_cast %49 : vector<1x16x128xbf16> to vector<16x128xbf16>
    %51 = arith.extf %50 : vector<16x128xbf16> to vector<16x128xf32>
    %cst_37 = arith.constant dense<0.000000e+00> : vector<16x128xf32>
    %52 = tpu.matmul %45, %1, %cst_37 {dimension_numbers = #tpu.dot_dimension_numbers<[1], [0], [0], [1], [0, 0, 1, 1], [], []>} : vector<16x128xbf16>, vector<128x128xbf16>, vector<16x128xf32> -> vector<16x128xf32>
    %53 = arith.addf %51, %52 : vector<16x128xf32>
    %54 = math.tanh %53 : vector<16x128xf32>
    %55 = arith.truncf %54 : vector<16x128xf32> to vector<16x128xbf16>
    %c4_38 = arith.constant 4 : index
    %c0_39 = arith.constant 0 : index
    %c0_40 = arith.constant 0 : index
    %56 = vector.load %arg10[%c4_38, %c0_39, %c0_40] : memref<8x16x128xbf16, #tpu.memory_space<vmem>>, vector<1x16x128xbf16>
    %57 = vector.shape_cast %56 : vector<1x16x128xbf16> to vector<16x128xbf16>
    %58 = vector.shape_cast %55 : vector<16x128xbf16> to vector<1x16x128xbf16>
    tpu.vector_store %arg10[%c4_38, %c0_39, %c0_40], %58 {strides = array<i32>} : memref<8x16x128xbf16, #tpu.memory_space<vmem>>, vector<1x16x128xbf16>,
    %c5 = arith.constant 5 : index
    %c0_41 = arith.constant 0 : index
    %c0_42 = arith.constant 0 : index
    %59 = vector.load %arg10[%c5, %c0_41, %c0_42] : memref<8x16x128xbf16, #tpu.memory_space<vmem>>, vector<1x16x128xbf16>
    %60 = vector.shape_cast %59 : vector<1x16x128xbf16> to vector<16x128xbf16>
    %61 = arith.extf %60 : vector<16x128xbf16> to vector<16x128xf32>
    %cst_43 = arith.constant dense<0.000000e+00> : vector<16x128xf32>
    %62 = tpu.matmul %55, %1, %cst_43 {dimension_numbers = #tpu.dot_dimension_numbers<[1], [0], [0], [1], [0, 0, 1, 1], [], []>} : vector<16x128xbf16>, vector<128x128xbf16>, vector<16x128xf32> -> vector<16x128xf32>
    %63 = arith.addf %61, %62 : vector<16x128xf32>
    %64 = math.tanh %63 : vector<16x128xf32>
    %65 = arith.truncf %64 : vector<16x128xf32> to vector<16x128xbf16>
    %c5_44 = arith.constant 5 : index
    %c0_45 = arith.constant 0 : index
    %c0_46 = arith.constant 0 : index
    %66 = vector.load %arg10[%c5_44, %c0_45, %c0_46] : memref<8x16x128xbf16, #tpu.memory_space<vmem>>, vector<1x16x128xbf16>
    %67 = vector.shape_cast %66 : vector<1x16x128xbf16> to vector<16x128xbf16>
    %68 = vector.shape_cast %65 : vector<16x128xbf16> to vector<1x16x128xbf16>
    tpu.vector_store %arg10[%c5_44, %c0_45, %c0_46], %68 {strides = array<i32>} : memref<8x16x128xbf16, #tpu.memory_space<vmem>>, vector<1x16x128xbf16>,
    %c6 = arith.constant 6 : index
    %c0_47 = arith.constant 0 : index
    %c0_48 = arith.constant 0 : index
    %69 = vector.load %arg10[%c6, %c0_47, %c0_48] : memref<8x16x128xbf16, #tpu.memory_space<vmem>>, vector<1x16x128xbf16>
    %70 = vector.shape_cast %69 : vector<1x16x128xbf16> to vector<16x128xbf16>
    %71 = arith.extf %70 : vector<16x128xbf16> to vector<16x128xf32>
    %cst_49 = arith.constant dense<0.000000e+00> : vector<16x128xf32>
    %72 = tpu.matmul %65, %1, %cst_49 {dimension_numbers = #tpu.dot_dimension_numbers<[1], [0], [0], [1], [0, 0, 1, 1], [], []>} : vector<16x128xbf16>, vector<128x128xbf16>, vector<16x128xf32> -> vector<16x128xf32>
    %73 = arith.addf %71, %72 : vector<16x128xf32>
    %74 = math.tanh %73 : vector<16x128xf32>
    %75 = arith.truncf %74 : vector<16x128xf32> to vector<16x128xbf16>
    %c6_50 = arith.constant 6 : index
    %c0_51 = arith.constant 0 : index
    %c0_52 = arith.constant 0 : index
    %76 = vector.load %arg10[%c6_50, %c0_51, %c0_52] : memref<8x16x128xbf16, #tpu.memory_space<vmem>>, vector<1x16x128xbf16>
    %77 = vector.shape_cast %76 : vector<1x16x128xbf16> to vector<16x128xbf16>
    %78 = vector.shape_cast %75 : vector<16x128xbf16> to vector<1x16x128xbf16>
    tpu.vector_store %arg10[%c6_50, %c0_51, %c0_52], %78 {strides = array<i32>} : memref<8x16x128xbf16, #tpu.memory_space<vmem>>, vector<1x16x128xbf16>,
    %c7 = arith.constant 7 : index
    %c0_53 = arith.constant 0 : index
    %c0_54 = arith.constant 0 : index
    %79 = vector.load %arg10[%c7, %c0_53, %c0_54] : memref<8x16x128xbf16, #tpu.memory_space<vmem>>, vector<1x16x128xbf16>
    %80 = vector.shape_cast %79 : vector<1x16x128xbf16> to vector<16x128xbf16>
    %81 = arith.extf %80 : vector<16x128xbf16> to vector<16x128xf32>
    %cst_55 = arith.constant dense<0.000000e+00> : vector<16x128xf32>
    %82 = tpu.matmul %75, %1, %cst_55 {dimension_numbers = #tpu.dot_dimension_numbers<[1], [0], [0], [1], [0, 0, 1, 1], [], []>} : vector<16x128xbf16>, vector<128x128xbf16>, vector<16x128xf32> -> vector<16x128xf32>
    %83 = arith.addf %81, %82 : vector<16x128xf32>
    %84 = math.tanh %83 : vector<16x128xf32>
    %85 = arith.truncf %84 : vector<16x128xf32> to vector<16x128xbf16>
    %c7_56 = arith.constant 7 : index
    %c0_57 = arith.constant 0 : index
    %c0_58 = arith.constant 0 : index
    %86 = vector.load %arg10[%c7_56, %c0_57, %c0_58] : memref<8x16x128xbf16, #tpu.memory_space<vmem>>, vector<1x16x128xbf16>
    %87 = vector.shape_cast %86 : vector<1x16x128xbf16> to vector<16x128xbf16>
    %88 = vector.shape_cast %85 : vector<16x128xbf16> to vector<1x16x128xbf16>
    tpu.vector_store %arg10[%c7_56, %c0_57, %c0_58], %88 {strides = array<i32>} : memref<8x16x128xbf16, #tpu.memory_space<vmem>>, vector<1x16x128xbf16>,
    %c0_59 = arith.constant 0 : index
    %c0_60 = arith.constant 0 : index
    %89 = vector.load %arg4[%c0_59, %c0_60] : memref<128x128xbf16, #tpu.memory_space<vmem>>, vector<128x128xbf16>
    %c0_61 = arith.constant 0 : index
    %c0_62 = arith.constant 0 : index
    %90 = vector.load %arg5[%c0_61, %c0_62] : memref<128x128xbf16, #tpu.memory_space<vmem>>, vector<128x128xbf16>
    %c0_63 = arith.constant 0 : index
    %c0_64 = arith.constant 0 : index
    %91 = vector.load %arg6[%c0_63, %c0_64] : memref<1x128xf32, #tpu.memory_space<vmem>>, vector<1x128xf32>
    %c0_65 = arith.constant 0 : index
    %c0_66 = arith.constant 0 : index
    %c0_67 = arith.constant 0 : index
    %92 = vector.load %arg10[%c0_65, %c0_66, %c0_67] : memref<8x16x128xbf16, #tpu.memory_space<vmem>>, vector<8x16x128xbf16>
    %93 = vector.shape_cast %92 : vector<8x16x128xbf16> to vector<128x128xbf16>
    %cst_68 = arith.constant dense<0.000000e+00> : vector<128x128xf32>
    %94 = tpu.matmul %93, %89, %cst_68 {dimension_numbers = #tpu.dot_dimension_numbers<[1], [0], [0], [1], [0, 0, 1, 1], [], []>} : vector<128x128xbf16>, vector<128x128xbf16>, vector<128x128xf32> -> vector<128x128xf32>
    %95 = vector.broadcast %91 : vector<1x128xf32> to vector<128x128xf32>
    %96 = arith.addf %94, %95 : vector<128x128xf32>
    %97 = vector.shape_cast %96 : vector<128x128xf32> to vector<8x16x128xf32>
    %98 = arith.truncf %97 : vector<8x16x128xf32> to vector<8x16x128xbf16>
    %c0_69 = arith.constant 0 : index
    %c0_70 = arith.constant 0 : index
    %c0_71 = arith.constant 0 : index
    %99 = vector.load %arg10[%c0_69, %c0_70, %c0_71] : memref<8x16x128xbf16, #tpu.memory_space<vmem>>, vector<8x16x128xbf16>
    tpu.vector_store %arg10[%c0_69, %c0_70, %c0_71], %98 {strides = array<i32>} : memref<8x16x128xbf16, #tpu.memory_space<vmem>>, vector<8x16x128xbf16>,
    %c0_72 = arith.constant 0 : index
    %c0_73 = arith.constant 0 : index
    %c0_74 = arith.constant 0 : index
    %100 = vector.load %arg10[%c0_72, %c0_73, %c0_74] : memref<8x16x128xbf16, #tpu.memory_space<vmem>>, vector<1x16x128xbf16>
    %101 = vector.shape_cast %100 : vector<1x16x128xbf16> to vector<16x128xbf16>
    %102 = arith.extf %101 : vector<16x128xbf16> to vector<16x128xf32>
    %103 = math.tanh %102 : vector<16x128xf32>
    %104 = arith.truncf %103 : vector<16x128xf32> to vector<16x128xbf16>
    %c1_75 = arith.constant 1 : index
    %c0_76 = arith.constant 0 : index
    %c0_77 = arith.constant 0 : index
    %105 = vector.load %arg10[%c1_75, %c0_76, %c0_77] : memref<8x16x128xbf16, #tpu.memory_space<vmem>>, vector<1x16x128xbf16>
    %106 = vector.shape_cast %105 : vector<1x16x128xbf16> to vector<16x128xbf16>
    %107 = arith.extf %106 : vector<16x128xbf16> to vector<16x128xf32>
    %cst_78 = arith.constant dense<0.000000e+00> : vector<16x128xf32>
    %108 = tpu.matmul %104, %90, %cst_78 {dimension_numbers = #tpu.dot_dimension_numbers<[1], [0], [0], [1], [0, 0, 1, 1], [], []>} : vector<16x128xbf16>, vector<128x128xbf16>, vector<16x128xf32> -> vector<16x128xf32>
    %109 = arith.addf %107, %108 : vector<16x128xf32>
    %110 = math.tanh %109 : vector<16x128xf32>
    %111 = arith.truncf %110 : vector<16x128xf32> to vector<16x128xbf16>
    %c2_79 = arith.constant 2 : index
    %c0_80 = arith.constant 0 : index
    %c0_81 = arith.constant 0 : index
    %112 = vector.load %arg10[%c2_79, %c0_80, %c0_81] : memref<8x16x128xbf16, #tpu.memory_space<vmem>>, vector<1x16x128xbf16>
    %113 = vector.shape_cast %112 : vector<1x16x128xbf16> to vector<16x128xbf16>
    %114 = arith.extf %113 : vector<16x128xbf16> to vector<16x128xf32>
    %cst_82 = arith.constant dense<0.000000e+00> : vector<16x128xf32>
    %115 = tpu.matmul %111, %90, %cst_82 {dimension_numbers = #tpu.dot_dimension_numbers<[1], [0], [0], [1], [0, 0, 1, 1], [], []>} : vector<16x128xbf16>, vector<128x128xbf16>, vector<16x128xf32> -> vector<16x128xf32>
    %116 = arith.addf %114, %115 : vector<16x128xf32>
    %117 = math.tanh %116 : vector<16x128xf32>
    %118 = arith.truncf %117 : vector<16x128xf32> to vector<16x128xbf16>
    %c3_83 = arith.constant 3 : index
    %c0_84 = arith.constant 0 : index
    %c0_85 = arith.constant 0 : index
    %119 = vector.load %arg10[%c3_83, %c0_84, %c0_85] : memref<8x16x128xbf16, #tpu.memory_space<vmem>>, vector<1x16x128xbf16>
    %120 = vector.shape_cast %119 : vector<1x16x128xbf16> to vector<16x128xbf16>
    %121 = arith.extf %120 : vector<16x128xbf16> to vector<16x128xf32>
    %cst_86 = arith.constant dense<0.000000e+00> : vector<16x128xf32>
    %122 = tpu.matmul %118, %90, %cst_86 {dimension_numbers = #tpu.dot_dimension_numbers<[1], [0], [0], [1], [0, 0, 1, 1], [], []>} : vector<16x128xbf16>, vector<128x128xbf16>, vector<16x128xf32> -> vector<16x128xf32>
    %123 = arith.addf %121, %122 : vector<16x128xf32>
    %124 = math.tanh %123 : vector<16x128xf32>
    %125 = arith.truncf %124 : vector<16x128xf32> to vector<16x128xbf16>
    %c4_87 = arith.constant 4 : index
    %c0_88 = arith.constant 0 : index
    %c0_89 = arith.constant 0 : index
    %126 = vector.load %arg10[%c4_87, %c0_88, %c0_89] : memref<8x16x128xbf16, #tpu.memory_space<vmem>>, vector<1x16x128xbf16>
    %127 = vector.shape_cast %126 : vector<1x16x128xbf16> to vector<16x128xbf16>
    %128 = arith.extf %127 : vector<16x128xbf16> to vector<16x128xf32>
    %cst_90 = arith.constant dense<0.000000e+00> : vector<16x128xf32>
    %129 = tpu.matmul %125, %90, %cst_90 {dimension_numbers = #tpu.dot_dimension_numbers<[1], [0], [0], [1], [0, 0, 1, 1], [], []>} : vector<16x128xbf16>, vector<128x128xbf16>, vector<16x128xf32> -> vector<16x128xf32>
    %130 = arith.addf %128, %129 : vector<16x128xf32>
    %131 = math.tanh %130 : vector<16x128xf32>
    %132 = arith.truncf %131 : vector<16x128xf32> to vector<16x128xbf16>
    %c5_91 = arith.constant 5 : index
    %c0_92 = arith.constant 0 : index
    %c0_93 = arith.constant 0 : index
    %133 = vector.load %arg10[%c5_91, %c0_92, %c0_93] : memref<8x16x128xbf16, #tpu.memory_space<vmem>>, vector<1x16x128xbf16>
    %134 = vector.shape_cast %133 : vector<1x16x128xbf16> to vector<16x128xbf16>
    %135 = arith.extf %134 : vector<16x128xbf16> to vector<16x128xf32>
    %cst_94 = arith.constant dense<0.000000e+00> : vector<16x128xf32>
    %136 = tpu.matmul %132, %90, %cst_94 {dimension_numbers = #tpu.dot_dimension_numbers<[1], [0], [0], [1], [0, 0, 1, 1], [], []>} : vector<16x128xbf16>, vector<128x128xbf16>, vector<16x128xf32> -> vector<16x128xf32>
    %137 = arith.addf %135, %136 : vector<16x128xf32>
    %138 = math.tanh %137 : vector<16x128xf32>
    %139 = arith.truncf %138 : vector<16x128xf32> to vector<16x128xbf16>
    %c6_95 = arith.constant 6 : index
    %c0_96 = arith.constant 0 : index
    %c0_97 = arith.constant 0 : index
    %140 = vector.load %arg10[%c6_95, %c0_96, %c0_97] : memref<8x16x128xbf16, #tpu.memory_space<vmem>>, vector<1x16x128xbf16>
    %141 = vector.shape_cast %140 : vector<1x16x128xbf16> to vector<16x128xbf16>
    %142 = arith.extf %141 : vector<16x128xbf16> to vector<16x128xf32>
    %cst_98 = arith.constant dense<0.000000e+00> : vector<16x128xf32>
    %143 = tpu.matmul %139, %90, %cst_98 {dimension_numbers = #tpu.dot_dimension_numbers<[1], [0], [0], [1], [0, 0, 1, 1], [], []>} : vector<16x128xbf16>, vector<128x128xbf16>, vector<16x128xf32> -> vector<16x128xf32>
    %144 = arith.addf %142, %143 : vector<16x128xf32>
    %145 = math.tanh %144 : vector<16x128xf32>
    %146 = arith.truncf %145 : vector<16x128xf32> to vector<16x128xbf16>
    %c7_99 = arith.constant 7 : index
    %c0_100 = arith.constant 0 : index
    %c0_101 = arith.constant 0 : index
    %147 = vector.load %arg10[%c7_99, %c0_100, %c0_101] : memref<8x16x128xbf16, #tpu.memory_space<vmem>>, vector<1x16x128xbf16>
    %148 = vector.shape_cast %147 : vector<1x16x128xbf16> to vector<16x128xbf16>
    %149 = arith.extf %148 : vector<16x128xbf16> to vector<16x128xf32>
    %cst_102 = arith.constant dense<0.000000e+00> : vector<16x128xf32>
    %150 = tpu.matmul %146, %90, %cst_102 {dimension_numbers = #tpu.dot_dimension_numbers<[1], [0], [0], [1], [0, 0, 1, 1], [], []>} : vector<16x128xbf16>, vector<128x128xbf16>, vector<16x128xf32> -> vector<16x128xf32>
    %151 = arith.addf %149, %150 : vector<16x128xf32>
    %152 = math.tanh %151 : vector<16x128xf32>
    %153 = arith.truncf %152 : vector<16x128xf32> to vector<16x128xbf16>
    %c0_103 = arith.constant 0 : index
    %c0_104 = arith.constant 0 : index
    %154 = vector.load %arg7[%c0_103, %c0_104] : memref<128x128xbf16, #tpu.memory_space<vmem>>, vector<128x128xbf16>
    %cst_105 = arith.constant dense<0.000000e+00> : vector<16x128xf32>
    %155 = tpu.matmul %153, %154, %cst_105 {dimension_numbers = #tpu.dot_dimension_numbers<[1], [0], [0], [1], [0, 0, 1, 1], [], []>} : vector<16x128xbf16>, vector<128x128xbf16>, vector<16x128xf32> -> vector<16x128xf32>
    %c0_106 = arith.constant 0 : index
    %c0_107 = arith.constant 0 : index
    %156 = vector.load %arg8[%c0_106, %c0_107] : memref<1x128xf32, #tpu.memory_space<vmem>>, vector<1x128xf32>
    %157 = vector.broadcast %156 : vector<1x128xf32> to vector<16x128xf32>
    %158 = arith.addf %155, %157 : vector<16x128xf32>
    %c0_108 = arith.constant 0 : index
    %c0_109 = arith.constant 0 : index
    %159 = vector.load %arg9[%c0_108, %c0_109] : memref<16x128xf32, #tpu.memory_space<vmem>>, vector<16x128xf32>
    tpu.vector_store %arg9[%c0_108, %c0_109], %158 {strides = array<i32>} : memref<16x128xf32, #tpu.memory_space<vmem>>, vector<16x128xf32>,
    return
  }
}

</mosaic_0001>

<llo_original>
// kernel: rnn_model_forward.1
$region0: #{rnn_model_forward.1}
  #allocation0 [shape = 'u32[]', space=smem, size = 0x4, offset = 0x4, fixed_abs, tag = 'smem constant byte address 0x4 - core index']
  #allocation1 [shape = 'u32[144,128]{1,0:T(1,128)}', space=vmem, size = 0x12000, scoped, tag = 'internal scratch']
  #allocation2 [shape = 'bf16[8,16,128]{2,1,0:T(8,128)(2,1)}', space=vmem, size = 0x8000, scoped, tag = 'scratch operand']
  %s0 = inlined_call_operand.vmem [shape: bf16[8,16,16], index: 0, kind: input, shape index: {}]
  %s1 = inlined_call_operand.vmem [shape: bf16[16,128], index: 1, kind: input, shape index: {}]
  %s2 = inlined_call_operand.vmem [shape: bf16[128,128], index: 2, kind: input, shape index: {}]
  %s3 = inlined_call_operand.vmem [shape: f32[1,128], index: 3, kind: input, shape index: {}]
  %s4 = inlined_call_operand.hbm [shape: bf16[128,128], index: 4, kind: input, shape index: {}]
  %s5 = inlined_call_operand.hbm [shape: bf16[128,128], index: 5, kind: input, shape index: {}]
  %s6 = inlined_call_operand.vmem [shape: f32[1,128], index: 6, kind: input, shape index: {}]
  %s7 = inlined_call_operand.hbm [shape: bf16[128,128], index: 7, kind: input, shape index: {}]
  %s8 = inlined_call_operand.vmem [shape: f32[1,128], index: 8, kind: input, shape index: {}]
  %s9 = inlined_call_operand.vmem [shape: f32[16,128], index: 9, kind: output, shape index: {}]
  %s10 = sld [smem:[#allocation0]]
  $region58: #{rnn_model_forward.1} parent=0
    _
  %s12 = ssub.s32 1, %s10
  %s13 = scalar_select 0, %s12, %s10
  $region1: #{rnn_model_forward.1} parent=0
    #allocation3 [shape = 'u8[32768]{0}', space=vmem, size = 0x8000, scoped, tag = 'input window, operand 4, single buffered']
    #allocation4 [shape = 's32[1]{0}', space=sflag, size = 0x4, scoped, tag = 'scoped memory for rnn_model_forward.1']
    #allocation5 [shape = 'u8[32768]{0}', space=vmem, size = 0x8000, scoped, tag = 'input window, operand 5, single buffered']
    #allocation6 [shape = 's32[1]{0}', space=sflag, size = 0x4, scoped, tag = 'scoped memory for rnn_model_forward.1']
    #allocation7 [shape = 'u8[32768]{0}', space=vmem, size = 0x8000, scoped, tag = 'input window, operand 7, single buffered']
    %14 = vsyncpa [#allocation4], 0
    %15 = vsyncpa [#allocation6], 0
    // Predicated region
    $region2: #{rnn_model_forward.1} parent=1 // pred_check
      _
    $region3: #{rnn_model_forward.1} parent=1 // pred_check_branch
      %17 = sbr.rel (0) target = $region5
    $region4: #{rnn_model_forward.1} parent=1 // pred_region
      _
    $region5: #{rnn_model_forward.1} parent=1 // pred_fallthru
      _
    // Predicated region
    $region6: #{rnn_model_forward.1} parent=1 // pred_check
      _
    $region7: #{rnn_model_forward.1} parent=1 // pred_check_branch
      %19 = sbr.rel (0) target = $region9
    $region8: #{rnn_model_forward.1} parent=1 // pred_region
      _
    $region9: #{rnn_model_forward.1} parent=1 // pred_fallthru
      _
    // Predicated region
    $region10: #{rnn_model_forward.1} parent=1 // pred_check
      _
    $region11: #{rnn_model_forward.1} parent=1 // pred_check_branch
      %21 = sbr.rel (0) target = $region13
    $region12: #{rnn_model_forward.1} parent=1 // pred_region
      _
    $region13: #{rnn_model_forward.1} parent=1 // pred_fallthru
      _
    // Predicated region
    $region14: #{rnn_model_forward.1} parent=1 // pred_check
      _
    $region15: #{rnn_model_forward.1} parent=1 // pred_check_branch
      %23 = sbr.rel (0) target = $region17
    $region16: #{rnn_model_forward.1} parent=1 // pred_region
      _
    $region17: #{rnn_model_forward.1} parent=1 // pred_fallthru
      _
    // Predicated region
    $region18: #{rnn_model_forward.1} parent=1 // pred_check
      _
    $region19: #{rnn_model_forward.1} parent=1 // pred_check_branch
      %25 = sbr.rel (0) target = $region21
    $region20: #{rnn_model_forward.1} parent=1 // pred_region
      %s27 = ssub.s32 1024, 1024
      %28 = vsyncadd [#allocation4], %s27
      %s29 = sshll.u32 [#allocation3], 4
      %s30 = int_to_ptr.vmem [resolvable:$true] %s29
      %35 = dma.hbm_to_vmem [thread:$0]  %s4, 1024, %s30, [#allocation4], 64, 64, 4
    $region21: #{rnn_model_forward.1} parent=1 // pred_fallthru
      _
    // Predicated region
    $region22: #{rnn_model_forward.1} parent=1 // pred_check
      _
    $region23: #{rnn_model_forward.1} parent=1 // pred_check_branch
      %37 = sbr.rel (0) target = $region25
    $region24: #{rnn_model_forward.1} parent=1 // pred_region
      %s39 = ssub.s32 1024, 1024
      %40 = vsyncadd [#allocation6], %s39
      %s41 = sshll.u32 [#allocation5], 4
      %s42 = int_to_ptr.vmem [resolvable:$true] %s41
      %47 = dma.hbm_to_vmem [thread:$0]  %s5, 1024, %s42, [#allocation6], 64, 64, 4
    $region25: #{rnn_model_forward.1} parent=1 // pred_fallthru
      _
    // Predicated region
    $region26: #{rnn_model_forward.1} parent=1 // pred_check
      _
    $region27: #{rnn_model_forward.1} parent=1 // pred_check_branch
      %49 = sbr.rel (0) target = $region29
    $region28: #{rnn_model_forward.1} parent=1 // pred_region
      _
    $region29: #{rnn_model_forward.1} parent=1 // pred_fallthru
      _
    // Predicated region
    $region30: #{rnn_model_forward.1} parent=1 // pred_check
      _
    $region31: #{rnn_model_forward.1} parent=1 // pred_check_branch
      %51 = sbr.rel (0) target = $region33
    $region32: #{rnn_model_forward.1} parent=1 // pred_region
      %s53 = ssub.s32 1024, 1024
      %54 = vsyncadd [#allocation6], %s53
      %s55 = sshll.u32 [#allocation7], 4
      %s56 = int_to_ptr.vmem [resolvable:$true] %s55
      %61 = dma.hbm_to_vmem [thread:$0]  %s7, 1024, %s56, [#allocation6], 64, 64, 4
    $region33: #{rnn_model_forward.1} parent=1 // pred_fallthru
      _
    // Predicated region
    $region34: #{rnn_model_forward.1} parent=1 // pred_check
      _
    $region35: #{rnn_model_forward.1} parent=1 // pred_check_branch
      %63 = sbr.rel (0) target = $region37
    $region36: #{rnn_model_forward.1} parent=1 // pred_region
      _
    $region37: #{rnn_model_forward.1} parent=1 // pred_fallthru
      _
    // Predicated region
    $region38: #{rnn_model_forward.1} parent=1 // pred_check
      _
    $region39: #{rnn_model_forward.1} parent=1 // pred_check_branch
      %65 = sbr.rel (0) target = $region41
    $region40: #{rnn_model_forward.1} parent=1 // pred_region
      %66 = dma.done [#allocation4], 1024
    $region41: #{rnn_model_forward.1} parent=1 // pred_fallthru
      _
    // Predicated region
    $region42: #{rnn_model_forward.1} parent=1 // pred_check
      _
    $region43: #{rnn_model_forward.1} parent=1 // pred_check_branch
      %68 = sbr.rel (0) target = $region45
    $region44: #{rnn_model_forward.1} parent=1 // pred_region
      %69 = dma.done [#allocation6], 1024
    $region45: #{rnn_model_forward.1} parent=1 // pred_fallthru
      _
    // Predicated region
    $region46: #{rnn_model_forward.1} parent=1 // pred_check
      _
    $region47: #{rnn_model_forward.1} parent=1 // pred_check_branch
      %71 = sbr.rel (0) target = $region49
    $region48: #{rnn_model_forward.1} parent=1 // pred_region
      %72 = dma.done [#allocation6], 1024
    $region49: #{rnn_model_forward.1} parent=1 // pred_fallthru
      _
    %v74 = vld [vmem:[%s1] sm:$0xf]
    %v75 = vld [vmem:[%s1 + $0x4] sm:$0xf]
    %v76 = vld [vmem:[%s2] sm:$0xf]
    %v77 = vld [vmem:[%s2 + $0x4] sm:$0xf]
    %v78 = vld [vmem:[%s2 + $0x8] sm:$0xf]
    %v79 = vld [vmem:[%s2 + $0xc] sm:$0xf]
    %v80 = vld [vmem:[%s2 + $0x10] sm:$0xf]
    %v81 = vld [vmem:[%s2 + $0x14] sm:$0xf]
    %v82 = vld [vmem:[%s2 + $0x18] sm:$0xf]
    %v83 = vld [vmem:[%s2 + $0x1c] sm:$0xf]
    %v84 = vld [vmem:[%s2 + $0x20] sm:$0xf]
    %v85 = vld [vmem:[%s2 + $0x24] sm:$0xf]
    %v86 = vld [vmem:[%s2 + $0x28] sm:$0xf]
    %v87 = vld [vmem:[%s2 + $0x2c] sm:$0xf]
    %v88 = vld [vmem:[%s2 + $0x30] sm:$0xf]
    %v89 = vld [vmem:[%s2 + $0x34] sm:$0xf]
    %v90 = vld [vmem:[%s2 + $0x38] sm:$0xf]
    %v91 = vld [vmem:[%s2 + $0x3c] sm:$0xf]
    %v92 = vld [vmem:[%s3] sm:$0x1]
    %v93 = vld [vmem:[%s0] sm:$0xf]
    %v94 = vld [vmem:[%s0 + $0x4] sm:$0xf]
    %v95 = vld [vmem:[%s0 + $0x8] sm:$0xf]
    %v96 = vld [vmem:[%s0 + $0xc] sm:$0xf]
    %v97 = vld [vmem:[%s0 + $0x10] sm:$0xf]
    %v98 = vld [vmem:[%s0 + $0x14] sm:$0xf]
    %v99 = vld [vmem:[%s0 + $0x18] sm:$0xf]
    %v100 = vld [vmem:[%s0 + $0x1c] sm:$0xf]
    %v101 = vld [vmem:[%s0 + $0x20] sm:$0xf]
    %v102 = vld [vmem:[%s0 + $0x24] sm:$0xf]
    %v103 = vld [vmem:[%s0 + $0x28] sm:$0xf]
    %v104 = vld [vmem:[%s0 + $0x2c] sm:$0xf]
    %v105 = vld [vmem:[%s0 + $0x30] sm:$0xf]
    %v106 = vld [vmem:[%s0 + $0x34] sm:$0xf]
    %v107 = vld [vmem:[%s0 + $0x38] sm:$0xf]
    %v108 = vld [vmem:[%s0 + $0x3c] sm:$0xf]
    %v110 = vlaneseq
    %v111 = vshrl.u32 %v110, 7
    %v112 = vsub.s32 0, %v111
    %v113 = vrot.slane %v92, %v112
    %v131 = vunpack.c.l.b16 %v93
    %v132 = vunpack.c.l.b16 %v94
    %v133 = vunpack.c.l.b16 %v95
    %v134 = vunpack.c.l.b16 %v96
    %v135 = vunpack.c.l.b16 %v97
    %v136 = vunpack.c.l.b16 %v98
    %v137 = vunpack.c.l.b16 %v99
    %v138 = vunpack.c.l.b16 %v100
    %v139 = vunpack.c.l.b16 %v101
    %v140 = vunpack.c.l.b16 %v102
    %v141 = vunpack.c.l.b16 %v103
    %v142 = vunpack.c.l.b16 %v104
    %v143 = vunpack.c.l.b16 %v105
    %v144 = vunpack.c.l.b16 %v106
    %v145 = vunpack.c.l.b16 %v107
    %v146 = vunpack.c.l.b16 %v108
    %v147 = vpack.c.b16 %v132, %v131
    %v148 = vpack.c.b16 %v134, %v133
    %v149 = vpack.c.b16 %v136, %v135
    %v150 = vpack.c.b16 %v138, %v137
    %v151 = vpack.c.b16 %v140, %v139
    %v152 = vpack.c.b16 %v142, %v141
    %v153 = vpack.c.b16 %v144, %v143
    %v154 = vpack.c.b16 %v146, %v145
    %v157 = vunpack.c.l.b16 %v74
    %v158 = vunpack.c.l.b16 %v75
    %v159 = vpack.c.b16 %v158, %v157
    %vm161 = vcmask 130048
    %v163 = vsel %vm161, %v147, 0
    %v166 = vsel %vm161, %v148, 0
    %v169 = vsel %vm161, %v149, 0
    %v172 = vsel %vm161, %v150, 0
    %v175 = vsel %vm161, %v151, 0
    %v178 = vsel %vm161, %v152, 0
    %v181 = vsel %vm161, %v153, 0
    %v184 = vsel %vm161, %v154, 0
    %186 = vmatprep.subr.bf16.mxu0 0
    %187 = vmatpush1.bf16.msra.mxu0 0
    %188 = vmatprep.subr.bf16.mxu0 0
    %189 = vmatpush1.bf16.msra.mxu0 0
    %190 = vmatprep.subr.bf16.mxu0 0
    %191 = vmatpush1.bf16.msra.mxu0 0
    %192 = vmatprep.subr.bf16.mxu0 0
    %193 = vmatpush1.bf16.msra.mxu0 0
    %194 = vmatprep.subr.bf16.mxu0 0
    %195 = vmatpush1.bf16.msra.mxu0 0
    %196 = vmatprep.subr.bf16.mxu0 0
    %197 = vmatpush1.bf16.msra.mxu0 0
    %198 = vmatprep.subr.bf16.mxu0 0
    %199 = vmatpush1.bf16.msra.mxu0 0
    %200 = vmatprep.subr.bf16.mxu0 0
    %201 = vmatpush1.bf16.msra.mxu0 %v159
    %202 = vmatprep.subr.bf16.mxu0 0
    %203 = vmatpush2.bf16.msra.mxu0 0
    %204 = vmatprep.subr.bf16.mxu0 0
    %205 = vmatpush2.bf16.msra.mxu0 0
    %206 = vmatprep.subr.bf16.mxu0 0
    %207 = vmatpush2.bf16.msra.mxu0 0
    %208 = vmatprep.subr.bf16.mxu0 0
    %209 = vmatpush2.bf16.msra.mxu0 0
    %210 = vmatprep.subr.bf16.mxu0 0
    %211 = vmatpush2.bf16.msra.mxu0 0
    %212 = vmatprep.subr.bf16.mxu0 0
    %213 = vmatpush2.bf16.msra.mxu0 0
    %214 = vmatprep.subr.bf16.mxu0 0
    %215 = vmatpush2.bf16.msra.mxu0 0
    %216 = vmatprep.subr.bf16.mxu0 0
    %217 = vmatpush2.bf16.msra.mxu0 0
    %218 = vmatprep.mubr.bf16.mxu0 0
    %219 = vmatmul.mubr.bf16.gmra.mxu0 %v163
    %v220 = vpop.f32.mrf.mxu0
    %v221 = vadd.f32 %v113, %v220
    %v222 = vpop.f32.mrf.mxu0
    %v223 = vpop.f32.mrf.mxu0
    %v224 = vadd.f32 %v113, %v223
    %v225 = vpop.f32.mrf.mxu0
    %226 = vmatprep.mubr.bf16.mxu0 0
    %227 = vmatmul.mubr.bf16.gmra.mxu0 %v166
    %v228 = vpop.f32.mrf.mxu0
    %v229 = vadd.f32 %v113, %v228
    %v230 = vpop.f32.mrf.mxu0
    %v231 = vpop.f32.mrf.mxu0
    %v232 = vadd.f32 %v113, %v231
    %v233 = vpop.f32.mrf.mxu0
    %234 = vmatprep.mubr.bf16.mxu0 0
    %235 = vmatmul.mubr.bf16.gmra.mxu0 %v169
    %v236 = vpop.f32.mrf.mxu0
    %v237 = vadd.f32 %v113, %v236
    %v238 = vpop.f32.mrf.mxu0
    %v239 = vpop.f32.mrf.mxu0
    %v240 = vadd.f32 %v113, %v239
    %v241 = vpop.f32.mrf.mxu0
    %242 = vmatprep.mubr.bf16.mxu0 0
    %243 = vmatmul.mubr.bf16.gmra.mxu0 %v172
    %v244 = vpop.f32.mrf.mxu0
    %v245 = vadd.f32 %v113, %v244
    %v246 = vpop.f32.mrf.mxu0
    %v247 = vpop.f32.mrf.mxu0
    %v248 = vadd.f32 %v113, %v247
    %v249 = vpop.f32.mrf.mxu0
    %250 = vmatprep.mubr.bf16.mxu0 0
    %251 = vmatmul.mubr.bf16.gmra.mxu0 %v175
    %v252 = vpop.f32.mrf.mxu0
    %v253 = vadd.f32 %v113, %v252
    %v254 = vpop.f32.mrf.mxu0
    %v255 = vpop.f32.mrf.mxu0
    %v256 = vadd.f32 %v113, %v255
    %v257 = vpop.f32.mrf.mxu0
    %258 = vmatprep.mubr.bf16.mxu0 0
    %259 = vmatmul.mubr.bf16.gmra.mxu0 %v178
    %v260 = vpop.f32.mrf.mxu0
    %v261 = vadd.f32 %v113, %v260
    %v262 = vpop.f32.mrf.mxu0
    %v263 = vpop.f32.mrf.mxu0
    %v264 = vadd.f32 %v113, %v263
    %v265 = vpop.f32.mrf.mxu0
    %266 = vmatprep.mubr.bf16.mxu0 0
    %267 = vmatmul.mubr.bf16.gmra.mxu0 %v181
    %v268 = vpop.f32.mrf.mxu0
    %v269 = vadd.f32 %v113, %v268
    %v270 = vpop.f32.mrf.mxu0
    %v271 = vpop.f32.mrf.mxu0
    %v272 = vadd.f32 %v113, %v271
    %v273 = vpop.f32.mrf.mxu0
    %274 = vmatprep.mubr.bf16.mxu0 0
    %275 = vmatmul.mubr.bf16.gmra.mxu0 %v184
    %v276 = vpop.f32.mrf.mxu0
    %v277 = vadd.f32 %v113, %v276
    %v278 = vpop.f32.mrf.mxu0
    %v279 = vpop.f32.mrf.mxu0
    %v280 = vadd.f32 %v113, %v279
    %v281 = vpop.f32.mrf.mxu0
    %282 = vdwg.mxu0
    %v283 = vpack.c.bf16 %v224, %v221
    %v284 = vpack.c.bf16 %v232, %v229
    %v285 = vpack.c.bf16 %v240, %v237
    %v286 = vpack.c.bf16 %v248, %v245
    %v287 = vpack.c.bf16 %v256, %v253
    %v288 = vpack.c.bf16 %v264, %v261
    %v289 = vpack.c.bf16 %v272, %v269
    %v290 = vpack.c.bf16 %v280, %v277
    %v299 = vunpack.c.l.b16 %v283
    %v300 = vunpack.c.h.b16 %v283
    %v301 = vunpack.c.l.b16 %v284
    %v302 = vunpack.c.h.b16 %v284
    %v303 = vunpack.c.l.b16 %v285
    %v304 = vunpack.c.h.b16 %v285
    %v305 = vunpack.c.l.b16 %v286
    %v306 = vunpack.c.h.b16 %v286
    %v307 = vunpack.c.l.b16 %v287
    %v308 = vunpack.c.h.b16 %v287
    %v309 = vunpack.c.l.b16 %v288
    %v310 = vunpack.c.h.b16 %v288
    %v311 = vunpack.c.l.b16 %v289
    %v312 = vunpack.c.h.b16 %v289
    %v313 = vunpack.c.l.b16 %v290
    %v314 = vunpack.c.h.b16 %v290
    %v315 = vpack.c.b16 %v299, %v299
    %v316 = vpack.c.b16 %v300, %v300
    %v317 = vpack.c.b16 %v301, %v301
    %v318 = vpack.c.b16 %v302, %v302
    %v319 = vpack.c.b16 %v303, %v303
    %v320 = vpack.c.b16 %v304, %v304
    %v321 = vpack.c.b16 %v305, %v305
    %v322 = vpack.c.b16 %v306, %v306
    %v323 = vpack.c.b16 %v307, %v307
    %v324 = vpack.c.b16 %v308, %v308
    %v325 = vpack.c.b16 %v309, %v309
    %v326 = vpack.c.b16 %v310, %v310
    %v327 = vpack.c.b16 %v311, %v311
    %v328 = vpack.c.b16 %v312, %v312
    %v329 = vpack.c.b16 %v313, %v313
    %v330 = vpack.c.b16 %v314, %v314
    %347 = vst [vmem:[#allocation2] sm:$0xf] %v315
    %348 = vst [vmem:[#allocation2 + $0x4] sm:$0xf] %v316
    %349 = vst [vmem:[#allocation2 + $0x8] sm:$0xf] %v317
    %350 = vst [vmem:[#allocation2 + $0xc] sm:$0xf] %v318
    %351 = vst [vmem:[#allocation2 + $0x10] sm:$0xf] %v319
    %352 = vst [vmem:[#allocation2 + $0x14] sm:$0xf] %v320
    %353 = vst [vmem:[#allocation2 + $0x18] sm:$0xf] %v321
    %354 = vst [vmem:[#allocation2 + $0x1c] sm:$0xf] %v322
    %355 = vst [vmem:[#allocation2 + $0x20] sm:$0xf] %v323
    %356 = vst [vmem:[#allocation2 + $0x24] sm:$0xf] %v324
    %357 = vst [vmem:[#allocation2 + $0x28] sm:$0xf] %v325
    %358 = vst [vmem:[#allocation2 + $0x2c] sm:$0xf] %v326
    %359 = vst [vmem:[#allocation2 + $0x30] sm:$0xf] %v327
    %360 = vst [vmem:[#allocation2 + $0x34] sm:$0xf] %v328
    %361 = vst [vmem:[#allocation2 + $0x38] sm:$0xf] %v329
    %362 = vst [vmem:[#allocation2 + $0x3c] sm:$0xf] %v330
    %v363 = vld [vmem:[#allocation2] sm:$0xf]
    %v364 = vld [vmem:[#allocation2 + $0x4] sm:$0xf]
    %v365 = vunpack.c.l.bf16 %v363
    %v366 = vunpack.c.l.bf16 %v364
    %v367 = vtanh.pop %v365
    %v368 = vtanh.pop %v366
    %v369 = vpack.c.bf16 %v368, %v367
    %v371 = vunpack.c.l.b16 %v369
    %v372 = vunpack.c.h.b16 %v369
    %v373 = vpack.c.b16 %v371, %v371
    %v374 = vpack.c.b16 %v372, %v372
    %377 = vst [vmem:[#allocation2] sm:$0xf] %v373
    %378 = vst [vmem:[#allocation2 + $0x4] sm:$0xf] %v374
    %s379 = scalar_lea.vmem [#allocation2], 8
    %v380 = vld [vmem:[%s379] sm:$0xf]
    %v381 = vld [vmem:[%s379 + $0x4] sm:$0xf]
    %v382 = vunpack.c.l.bf16 %v380
    %v383 = vunpack.c.l.bf16 %v381
    %v400 = vunpack.c.l.b16 %v76
    %v401 = vunpack.c.l.b16 %v77
    %v402 = vunpack.c.l.b16 %v78
    %v403 = vunpack.c.l.b16 %v79
    %v404 = vunpack.c.l.b16 %v80
    %v405 = vunpack.c.l.b16 %v81
    %v406 = vunpack.c.l.b16 %v82
    %v407 = vunpack.c.l.b16 %v83
    %v408 = vunpack.c.l.b16 %v84
    %v409 = vunpack.c.l.b16 %v85
    %v410 = vunpack.c.l.b16 %v86
    %v411 = vunpack.c.l.b16 %v87
    %v412 = vunpack.c.l.b16 %v88
    %v413 = vunpack.c.l.b16 %v89
    %v414 = vunpack.c.l.b16 %v90
    %v415 = vunpack.c.l.b16 %v91
    %v416 = vpack.c.b16 %v401, %v400
    %v417 = vpack.c.b16 %v403, %v402
    %v418 = vpack.c.b16 %v405, %v404
    %v419 = vpack.c.b16 %v407, %v406
    %v420 = vpack.c.b16 %v409, %v408
    %v421 = vpack.c.b16 %v411, %v410
    %v422 = vpack.c.b16 %v413, %v412
    %v423 = vpack.c.b16 %v415, %v414
    %432 = vmatprep.subr.bf16.mxu0 0
    %433 = vmatpush1.bf16.msra.mxu0 %v423
    %434 = vmatprep.subr.bf16.mxu0 0
    %435 = vmatpush1.bf16.msra.mxu0 %v422
    %436 = vmatprep.subr.bf16.mxu0 0
    %437 = vmatpush1.bf16.msra.mxu0 %v421
    %438 = vmatprep.subr.bf16.mxu0 0
    %439 = vmatpush1.bf16.msra.mxu0 %v420
    %440 = vmatprep.subr.bf16.mxu0 0
    %441 = vmatpush1.bf16.msra.mxu0 %v419
    %442 = vmatprep.subr.bf16.mxu0 0
    %443 = vmatpush1.bf16.msra.mxu0 %v418
    %444 = vmatprep.subr.bf16.mxu0 0
    %445 = vmatpush1.bf16.msra.mxu0 %v417
    %446 = vmatprep.subr.bf16.mxu0 0
    %447 = vmatpush1.bf16.msra.mxu0 %v416
    %448 = vmatprep.subr.bf16.mxu0 0
    %449 = vmatpush2.bf16.msra.mxu0 0
    %450 = vmatprep.subr.bf16.mxu0 0
    %451 = vmatpush2.bf16.msra.mxu0 0
    %452 = vmatprep.subr.bf16.mxu0 0
    %453 = vmatpush2.bf16.msra.mxu0 0
    %454 = vmatprep.subr.bf16.mxu0 0
    %455 = vmatpush2.bf16.msra.mxu0 0
    %456 = vmatprep.subr.bf16.mxu0 0
    %457 = vmatpush2.bf16.msra.mxu0 0
    %458 = vmatprep.subr.bf16.mxu0 0
    %459 = vmatpush2.bf16.msra.mxu0 0
    %460 = vmatprep.subr.bf16.mxu0 0
    %461 = vmatpush2.bf16.msra.mxu0 0
    %462 = vmatprep.subr.bf16.mxu0 0
    %463 = vmatpush2.bf16.msra.mxu0 0
    %464 = vmatprep.mubr.bf16.mxu0 0
    %465 = vmatmul.mubr.bf16.gmra.mxu0 %v369
    %v466 = vpop.f32.mrf.mxu0
    %v467 = vadd.f32 0.0, %v466
    %v468 = vpop.f32.mrf.mxu0
    %v469 = vpop.f32.mrf.mxu0
    %v470 = vadd.f32 0.0, %v469
    %v471 = vpop.f32.mrf.mxu0
    %472 = vdwg.mxu0
    %v473 = vadd.f32 %v382, %v467
    %v474 = vadd.f32 %v383, %v470
    %v475 = vtanh.pop %v473
    %v476 = vtanh.pop %v474
    %v477 = vpack.c.bf16 %v476, %v475
    %v479 = vunpack.c.l.b16 %v477
    %v480 = vunpack.c.h.b16 %v477
    %v481 = vpack.c.b16 %v479, %v479
    %v482 = vpack.c.b16 %v480, %v480
    %485 = vst [vmem:[%s379] sm:$0xf] %v481
    %486 = vst [vmem:[%s379 + $0x4] sm:$0xf] %v482
    %s487 = scalar_lea.vmem [#allocation2], 16
    %v488 = vld [vmem:[%s487] sm:$0xf]
    %v489 = vld [vmem:[%s487 + $0x4] sm:$0xf]
    %v490 = vunpack.c.l.bf16 %v488
    %v491 = vunpack.c.l.bf16 %v489
    %492 = vmatprep.subr.bf16.mxu0 0
    %493 = vmatpush1.bf16.msra.mxu0 %v423
    %494 = vmatprep.subr.bf16.mxu0 0
    %495 = vmatpush1.bf16.msra.mxu0 %v422
    %496 = vmatprep.subr.bf16.mxu0 0
    %497 = vmatpush1.bf16.msra.mxu0 %v421
    %498 = vmatprep.subr.bf16.mxu0 0
    %499 = vmatpush1.bf16.msra.mxu0 %v420
    %500 = vmatprep.subr.bf16.mxu0 0
    %501 = vmatpush1.bf16.msra.mxu0 %v419
    %502 = vmatprep.subr.bf16.mxu0 0
    %503 = vmatpush1.bf16.msra.mxu0 %v418
    %504 = vmatprep.subr.bf16.mxu0 0
    %505 = vmatpush1.bf16.msra.mxu0 %v417
    %506 = vmatprep.subr.bf16.mxu0 0
    %507 = vmatpush1.bf16.msra.mxu0 %v416
    %508 = vmatprep.subr.bf16.mxu0 0
    %509 = vmatpush2.bf16.msra.mxu0 0
    %510 = vmatprep.subr.bf16.mxu0 0
    %511 = vmatpush2.bf16.msra.mxu0 0
    %512 = vmatprep.subr.bf16.mxu0 0
    %513 = vmatpush2.bf16.msra.mxu0 0
    %514 = vmatprep.subr.bf16.mxu0 0
    %515 = vmatpush2.bf16.msra.mxu0 0
    %516 = vmatprep.subr.bf16.mxu0 0
    %517 = vmatpush2.bf16.msra.mxu0 0
    %518 = vmatprep.subr.bf16.mxu0 0
    %519 = vmatpush2.bf16.msra.mxu0 0
    %520 = vmatprep.subr.bf16.mxu0 0
    %521 = vmatpush2.bf16.msra.mxu0 0
    %522 = vmatprep.subr.bf16.mxu0 0
    %523 = vmatpush2.bf16.msra.mxu0 0
    %524 = vmatprep.mubr.bf16.mxu0 0
    %525 = vmatmul.mubr.bf16.gmra.mxu0 %v477
    %v526 = vpop.f32.mrf.mxu0
    %v527 = vadd.f32 0.0, %v526
    %v528 = vpop.f32.mrf.mxu0
    %v529 = vpop.f32.mrf.mxu0
    %v530 = vadd.f32 0.0, %v529
    %v531 = vpop.f32.mrf.mxu0
    %532 = vdwg.mxu0
    %v533 = vadd.f32 %v490, %v527
    %v534 = vadd.f32 %v491, %v530
    %v535 = vtanh.pop %v533
    %v536 = vtanh.pop %v534
    %v537 = vpack.c.bf16 %v536, %v535
    %v539 = vunpack.c.l.b16 %v537
    %v540 = vunpack.c.h.b16 %v537
    %v541 = vpack.c.b16 %v539, %v539
    %v542 = vpack.c.b16 %v540, %v540
    %545 = vst [vmem:[%s487] sm:$0xf] %v541
    %546 = vst [vmem:[%s487 + $0x4] sm:$0xf] %v542
    %s547 = scalar_lea.vmem [#allocation2], 24
    %v548 = vld [vmem:[%s547] sm:$0xf]
    %v549 = vld [vmem:[%s547 + $0x4] sm:$0xf]
    %v550 = vunpack.c.l.bf16 %v548
    %v551 = vunpack.c.l.bf16 %v549
    %552 = vmatprep.subr.bf16.mxu0 0
    %553 = vmatpush1.bf16.msra.mxu0 %v423
    %554 = vmatprep.subr.bf16.mxu0 0
    %555 = vmatpush1.bf16.msra.mxu0 %v422
    %556 = vmatprep.subr.bf16.mxu0 0
    %557 = vmatpush1.bf16.msra.mxu0 %v421
    %558 = vmatprep.subr.bf16.mxu0 0
    %559 = vmatpush1.bf16.msra.mxu0 %v420
    %560 = vmatprep.subr.bf16.mxu0 0
    %561 = vmatpush1.bf16.msra.mxu0 %v419
    %562 = vmatprep.subr.bf16.mxu0 0
    %563 = vmatpush1.bf16.msra.mxu0 %v418
    %564 = vmatprep.subr.bf16.mxu0 0
    %565 = vmatpush1.bf16.msra.mxu0 %v417
    %566 = vmatprep.subr.bf16.mxu0 0
    %567 = vmatpush1.bf16.msra.mxu0 %v416
    %568 = vmatprep.subr.bf16.mxu0 0
    %569 = vmatpush2.bf16.msra.mxu0 0
    %570 = vmatprep.subr.bf16.mxu0 0
    %571 = vmatpush2.bf16.msra.mxu0 0
    %572 = vmatprep.subr.bf16.mxu0 0
    %573 = vmatpush2.bf16.msra.mxu0 0
    %574 = vmatprep.subr.bf16.mxu0 0
    %575 = vmatpush2.bf16.msra.mxu0 0
    %576 = vmatprep.subr.bf16.mxu0 0
    %577 = vmatpush2.bf16.msra.mxu0 0
    %578 = vmatprep.subr.bf16.mxu0 0
    %579 = vmatpush2.bf16.msra.mxu0 0
    %580 = vmatprep.subr.bf16.mxu0 0
    %581 = vmatpush2.bf16.msra.mxu0 0
    %582 = vmatprep.subr.bf16.mxu0 0
    %583 = vmatpush2.bf16.msra.mxu0 0
    %584 = vmatprep.mubr.bf16.mxu0 0
    %585 = vmatmul.mubr.bf16.gmra.mxu0 %v537
    %v586 = vpop.f32.mrf.mxu0
    %v587 = vadd.f32 0.0, %v586
    %v588 = vpop.f32.mrf.mxu0
    %v589 = vpop.f32.mrf.mxu0
    %v590 = vadd.f32 0.0, %v589
    %v591 = vpop.f32.mrf.mxu0
    %592 = vdwg.mxu0
    %v593 = vadd.f32 %v550, %v587
    %v594 = vadd.f32 %v551, %v590
    %v595 = vtanh.pop %v593
    %v596 = vtanh.pop %v594
    %v597 = vpack.c.bf16 %v596, %v595
    %v599 = vunpack.c.l.b16 %v597
    %v600 = vunpack.c.h.b16 %v597
    %v601 = vpack.c.b16 %v599, %v599
    %v602 = vpack.c.b16 %v600, %v600
    %605 = vst [vmem:[%s547] sm:$0xf] %v601
    %606 = vst [vmem:[%s547 + $0x4] sm:$0xf] %v602
    %s607 = scalar_lea.vmem [#allocation2], 32
    %v608 = vld [vmem:[%s607] sm:$0xf]
    %v609 = vld [vmem:[%s607 + $0x4] sm:$0xf]
    %v610 = vunpack.c.l.bf16 %v608
    %v611 = vunpack.c.l.bf16 %v609
    %612 = vmatprep.subr.bf16.mxu0 0
    %613 = vmatpush1.bf16.msra.mxu0 %v423
    %614 = vmatprep.subr.bf16.mxu0 0
    %615 = vmatpush1.bf16.msra.mxu0 %v422
    %616 = vmatprep.subr.bf16.mxu0 0
    %617 = vmatpush1.bf16.msra.mxu0 %v421
    %618 = vmatprep.subr.bf16.mxu0 0
    %619 = vmatpush1.bf16.msra.mxu0 %v420
    %620 = vmatprep.subr.bf16.mxu0 0
    %621 = vmatpush1.bf16.msra.mxu0 %v419
    %622 = vmatprep.subr.bf16.mxu0 0
    %623 = vmatpush1.bf16.msra.mxu0 %v418
    %624 = vmatprep.subr.bf16.mxu0 0
    %625 = vmatpush1.bf16.msra.mxu0 %v417
    %626 = vmatprep.subr.bf16.mxu0 0
    %627 = vmatpush1.bf16.msra.mxu0 %v416
    %628 = vmatprep.subr.bf16.mxu0 0
    %629 = vmatpush2.bf16.msra.mxu0 0
    %630 = vmatprep.subr.bf16.mxu0 0
    %631 = vmatpush2.bf16.msra.mxu0 0
    %632 = vmatprep.subr.bf16.mxu0 0
    %633 = vmatpush2.bf16.msra.mxu0 0
    %634 = vmatprep.subr.bf16.mxu0 0
    %635 = vmatpush2.bf16.msra.mxu0 0
    %636 = vmatprep.subr.bf16.mxu0 0
    %637 = vmatpush2.bf16.msra.mxu0 0
    %638 = vmatprep.subr.bf16.mxu0 0
    %639 = vmatpush2.bf16.msra.mxu0 0
    %640 = vmatprep.subr.bf16.mxu0 0
    %641 = vmatpush2.bf16.msra.mxu0 0
    %642 = vmatprep.subr.bf16.mxu0 0
    %643 = vmatpush2.bf16.msra.mxu0 0
    %644 = vmatprep.mubr.bf16.mxu0 0
    %645 = vmatmul.mubr.bf16.gmra.mxu0 %v597
    %v646 = vpop.f32.mrf.mxu0
    %v647 = vadd.f32 0.0, %v646
    %v648 = vpop.f32.mrf.mxu0
    %v649 = vpop.f32.mrf.mxu0
    %v650 = vadd.f32 0.0, %v649
    %v651 = vpop.f32.mrf.mxu0
    %652 = vdwg.mxu0
    %v653 = vadd.f32 %v610, %v647
    %v654 = vadd.f32 %v611, %v650
    %v655 = vtanh.pop %v653
    %v656 = vtanh.pop %v654
    %v657 = vpack.c.bf16 %v656, %v655
    %v659 = vunpack.c.l.b16 %v657
    %v660 = vunpack.c.h.b16 %v657
    %v661 = vpack.c.b16 %v659, %v659
    %v662 = vpack.c.b16 %v660, %v660
    %665 = vst [vmem:[%s607] sm:$0xf] %v661
    %666 = vst [vmem:[%s607 + $0x4] sm:$0xf] %v662
    %s667 = scalar_lea.vmem [#allocation2], 40
    %v668 = vld [vmem:[%s667] sm:$0xf]
    %v669 = vld [vmem:[%s667 + $0x4] sm:$0xf]
    %v670 = vunpack.c.l.bf16 %v668
    %v671 = vunpack.c.l.bf16 %v669
    %672 = vmatprep.subr.bf16.mxu0 0
    %673 = vmatpush1.bf16.msra.mxu0 %v423
    %674 = vmatprep.subr.bf16.mxu0 0
    %675 = vmatpush1.bf16.msra.mxu0 %v422
    %676 = vmatprep.subr.bf16.mxu0 0
    %677 = vmatpush1.bf16.msra.mxu0 %v421
    %678 = vmatprep.subr.bf16.mxu0 0
    %679 = vmatpush1.bf16.msra.mxu0 %v420
    %680 = vmatprep.subr.bf16.mxu0 0
    %681 = vmatpush1.bf16.msra.mxu0 %v419
    %682 = vmatprep.subr.bf16.mxu0 0
    %683 = vmatpush1.bf16.msra.mxu0 %v418
    %684 = vmatprep.subr.bf16.mxu0 0
    %685 = vmatpush1.bf16.msra.mxu0 %v417
    %686 = vmatprep.subr.bf16.mxu0 0
    %687 = vmatpush1.bf16.msra.mxu0 %v416
    %688 = vmatprep.subr.bf16.mxu0 0
    %689 = vmatpush2.bf16.msra.mxu0 0
    %690 = vmatprep.subr.bf16.mxu0 0
    %691 = vmatpush2.bf16.msra.mxu0 0
    %692 = vmatprep.subr.bf16.mxu0 0
    %693 = vmatpush2.bf16.msra.mxu0 0
    %694 = vmatprep.subr.bf16.mxu0 0
    %695 = vmatpush2.bf16.msra.mxu0 0
    %696 = vmatprep.subr.bf16.mxu0 0
    %697 = vmatpush2.bf16.msra.mxu0 0
    %698 = vmatprep.subr.bf16.mxu0 0
    %699 = vmatpush2.bf16.msra.mxu0 0
    %700 = vmatprep.subr.bf16.mxu0 0
    %701 = vmatpush2.bf16.msra.mxu0 0
    %702 = vmatprep.subr.bf16.mxu0 0
    %703 = vmatpush2.bf16.msra.mxu0 0
    %704 = vmatprep.mubr.bf16.mxu0 0
    %705 = vmatmul.mubr.bf16.gmra.mxu0 %v657
    %v706 = vpop.f32.mrf.mxu0
    %v707 = vadd.f32 0.0, %v706
    %v708 = vpop.f32.mrf.mxu0
    %v709 = vpop.f32.mrf.mxu0
    %v710 = vadd.f32 0.0, %v709
    %v711 = vpop.f32.mrf.mxu0
    %712 = vdwg.mxu0
    %v713 = vadd.f32 %v670, %v707
    %v714 = vadd.f32 %v671, %v710
    %v715 = vtanh.pop %v713
    %v716 = vtanh.pop %v714
    %v717 = vpack.c.bf16 %v716, %v715
    %v719 = vunpack.c.l.b16 %v717
    %v720 = vunpack.c.h.b16 %v717
    %v721 = vpack.c.b16 %v719, %v719
    %v722 = vpack.c.b16 %v720, %v720
    %725 = vst [vmem:[%s667] sm:$0xf] %v721
    %726 = vst [vmem:[%s667 + $0x4] sm:$0xf] %v722
    %s727 = scalar_lea.vmem [#allocation2], 48
    %v728 = vld [vmem:[%s727] sm:$0xf]
    %v729 = vld [vmem:[%s727 + $0x4] sm:$0xf]
    %v730 = vunpack.c.l.bf16 %v728
    %v731 = vunpack.c.l.bf16 %v729
    %732 = vmatprep.subr.bf16.mxu0 0
    %733 = vmatpush1.bf16.msra.mxu0 %v423
    %734 = vmatprep.subr.bf16.mxu0 0
    %735 = vmatpush1.bf16.msra.mxu0 %v422
    %736 = vmatprep.subr.bf16.mxu0 0
    %737 = vmatpush1.bf16.msra.mxu0 %v421
    %738 = vmatprep.subr.bf16.mxu0 0
    %739 = vmatpush1.bf16.msra.mxu0 %v420
    %740 = vmatprep.subr.bf16.mxu0 0
    %741 = vmatpush1.bf16.msra.mxu0 %v419
    %742 = vmatprep.subr.bf16.mxu0 0
    %743 = vmatpush1.bf16.msra.mxu0 %v418
    %744 = vmatprep.subr.bf16.mxu0 0
    %745 = vmatpush1.bf16.msra.mxu0 %v417
    %746 = vmatprep.subr.bf16.mxu0 0
    %747 = vmatpush1.bf16.msra.mxu0 %v416
    %748 = vmatprep.subr.bf16.mxu0 0
    %749 = vmatpush2.bf16.msra.mxu0 0
    %750 = vmatprep.subr.bf16.mxu0 0
    %751 = vmatpush2.bf16.msra.mxu0 0
    %752 = vmatprep.subr.bf16.mxu0 0
    %753 = vmatpush2.bf16.msra.mxu0 0
    %754 = vmatprep.subr.bf16.mxu0 0
    %755 = vmatpush2.bf16.msra.mxu0 0
    %756 = vmatprep.subr.bf16.mxu0 0
    %757 = vmatpush2.bf16.msra.mxu0 0
    %758 = vmatprep.subr.bf16.mxu0 0
    %759 = vmatpush2.bf16.msra.mxu0 0
    %760 = vmatprep.subr.bf16.mxu0 0
    %761 = vmatpush2.bf16.msra.mxu0 0
    %762 = vmatprep.subr.bf16.mxu0 0
    %763 = vmatpush2.bf16.msra.mxu0 0
    %764 = vmatprep.mubr.bf16.mxu0 0
    %765 = vmatmul.mubr.bf16.gmra.mxu0 %v717
    %v766 = vpop.f32.mrf.mxu0
    %v767 = vadd.f32 0.0, %v766
    %v768 = vpop.f32.mrf.mxu0
    %v769 = vpop.f32.mrf.mxu0
    %v770 = vadd.f32 0.0, %v769
    %v771 = vpop.f32.mrf.mxu0
    %772 = vdwg.mxu0
    %v773 = vadd.f32 %v730, %v767
    %v774 = vadd.f32 %v731, %v770
    %v775 = vtanh.pop %v773
    %v776 = vtanh.pop %v774
    %v777 = vpack.c.bf16 %v776, %v775
    %v779 = vunpack.c.l.b16 %v777
    %v780 = vunpack.c.h.b16 %v777
    %v781 = vpack.c.b16 %v779, %v779
    %v782 = vpack.c.b16 %v780, %v780
    %785 = vst [vmem:[%s727] sm:$0xf] %v781
    %786 = vst [vmem:[%s727 + $0x4] sm:$0xf] %v782
    %s787 = scalar_lea.vmem [#allocation2], 56
    %v788 = vld [vmem:[%s787] sm:$0xf]
    %v789 = vld [vmem:[%s787 + $0x4] sm:$0xf]
    %v790 = vunpack.c.l.bf16 %v788
    %v791 = vunpack.c.l.bf16 %v789
    %792 = vmatprep.subr.bf16.mxu0 0
    %793 = vmatpush1.bf16.msra.mxu0 %v423
    %794 = vmatprep.subr.bf16.mxu0 0
    %795 = vmatpush1.bf16.msra.mxu0 %v422
    %796 = vmatprep.subr.bf16.mxu0 0
    %797 = vmatpush1.bf16.msra.mxu0 %v421
    %798 = vmatprep.subr.bf16.mxu0 0
    %799 = vmatpush1.bf16.msra.mxu0 %v420
    %800 = vmatprep.subr.bf16.mxu0 0
    %801 = vmatpush1.bf16.msra.mxu0 %v419
    %802 = vmatprep.subr.bf16.mxu0 0
    %803 = vmatpush1.bf16.msra.mxu0 %v418
    %804 = vmatprep.subr.bf16.mxu0 0
    %805 = vmatpush1.bf16.msra.mxu0 %v417
    %806 = vmatprep.subr.bf16.mxu0 0
    %807 = vmatpush1.bf16.msra.mxu0 %v416
    %808 = vmatprep.subr.bf16.mxu0 0
    %809 = vmatpush2.bf16.msra.mxu0 0
    %810 = vmatprep.subr.bf16.mxu0 0
    %811 = vmatpush2.bf16.msra.mxu0 0
    %812 = vmatprep.subr.bf16.mxu0 0
    %813 = vmatpush2.bf16.msra.mxu0 0
    %814 = vmatprep.subr.bf16.mxu0 0
    %815 = vmatpush2.bf16.msra.mxu0 0
    %816 = vmatprep.subr.bf16.mxu0 0
    %817 = vmatpush2.bf16.msra.mxu0 0
    %818 = vmatprep.subr.bf16.mxu0 0
    %819 = vmatpush2.bf16.msra.mxu0 0
    %820 = vmatprep.subr.bf16.mxu0 0
    %821 = vmatpush2.bf16.msra.mxu0 0
    %822 = vmatprep.subr.bf16.mxu0 0
    %823 = vmatpush2.bf16.msra.mxu0 0
    %824 = vmatprep.mubr.bf16.mxu0 0
    %825 = vmatmul.mubr.bf16.gmra.mxu0 %v777
    %v826 = vpop.f32.mrf.mxu0
    %v827 = vadd.f32 0.0, %v826
    %v828 = vpop.f32.mrf.mxu0
    %v829 = vpop.f32.mrf.mxu0
    %v830 = vadd.f32 0.0, %v829
    %v831 = vpop.f32.mrf.mxu0
    %832 = vdwg.mxu0
    %v833 = vadd.f32 %v790, %v827
    %v834 = vadd.f32 %v791, %v830
    %v835 = vtanh.pop %v833
    %v836 = vtanh.pop %v834
    %v837 = vpack.c.bf16 %v836, %v835
    %v839 = vunpack.c.l.b16 %v837
    %v840 = vunpack.c.h.b16 %v837
    %v841 = vpack.c.b16 %v839, %v839
    %v842 = vpack.c.b16 %v840, %v840
    %845 = vst [vmem:[%s787] sm:$0xf] %v841
    %846 = vst [vmem:[%s787 + $0x4] sm:$0xf] %v842
    %v847 = vld [vmem:[#allocation3] sm:$0xf]
    %v848 = vld [vmem:[#allocation3 + $0x4] sm:$0xf]
    %v849 = vld [vmem:[#allocation3 + $0x8] sm:$0xf]
    %v850 = vld [vmem:[#allocation3 + $0xc] sm:$0xf]
    %v851 = vld [vmem:[#allocation3 + $0x10] sm:$0xf]
    %v852 = vld [vmem:[#allocation3 + $0x14] sm:$0xf]
    %v853 = vld [vmem:[#allocation3 + $0x18] sm:$0xf]
    %v854 = vld [vmem:[#allocation3 + $0x1c] sm:$0xf]
    %v855 = vld [vmem:[#allocation3 + $0x20] sm:$0xf]
    %v856 = vld [vmem:[#allocation3 + $0x24] sm:$0xf]
    %v857 = vld [vmem:[#allocation3 + $0x28] sm:$0xf]
    %v858 = vld [vmem:[#allocation3 + $0x2c] sm:$0xf]
    %v859 = vld [vmem:[#allocation3 + $0x30] sm:$0xf]
    %v860 = vld [vmem:[#allocation3 + $0x34] sm:$0xf]
    %v861 = vld [vmem:[#allocation3 + $0x38] sm:$0xf]
    %v862 = vld [vmem:[#allocation3 + $0x3c] sm:$0xf]
    %v863 = vld [vmem:[#allocation5] sm:$0xf]
    %v864 = vld [vmem:[#allocation5 + $0x4] sm:$0xf]
    %v865 = vld [vmem:[#allocation5 + $0x8] sm:$0xf]
    %v866 = vld [vmem:[#allocation5 + $0xc] sm:$0xf]
    %v867 = vld [vmem:[#allocation5 + $0x10] sm:$0xf]
    %v868 = vld [vmem:[#allocation5 + $0x14] sm:$0xf]
    %v869 = vld [vmem:[#allocation5 + $0x18] sm:$0xf]
    %v870 = vld [vmem:[#allocation5 + $0x1c] sm:$0xf]
    %v871 = vld [vmem:[#allocation5 + $0x20] sm:$0xf]
    %v872 = vld [vmem:[#allocation5 + $0x24] sm:$0xf]
    %v873 = vld [vmem:[#allocation5 + $0x28] sm:$0xf]
    %v874 = vld [vmem:[#allocation5 + $0x2c] sm:$0xf]
    %v875 = vld [vmem:[#allocation5 + $0x30] sm:$0xf]
    %v876 = vld [vmem:[#allocation5 + $0x34] sm:$0xf]
    %v877 = vld [vmem:[#allocation5 + $0x38] sm:$0xf]
    %v878 = vld [vmem:[#allocation5 + $0x3c] sm:$0xf]
    %v879 = vld [vmem:[%s6] sm:$0x1]
    %v880 = vld [vmem:[#allocation2] sm:$0xf]
    %v881 = vld [vmem:[#allocation2 + $0x4] sm:$0xf]
    %v882 = vld [vmem:[#allocation2 + $0x8] sm:$0xf]
    %v883 = vld [vmem:[#allocation2 + $0xc] sm:$0xf]
    %v884 = vld [vmem:[#allocation2 + $0x10] sm:$0xf]
    %v885 = vld [vmem:[#allocation2 + $0x14] sm:$0xf]
    %v886 = vld [vmem:[#allocation2 + $0x18] sm:$0xf]
    %v887 = vld [vmem:[#allocation2 + $0x1c] sm:$0xf]
    %v888 = vld [vmem:[#allocation2 + $0x20] sm:$0xf]
    %v889 = vld [vmem:[#allocation2 + $0x24] sm:$0xf]
    %v890 = vld [vmem:[#allocation2 + $0x28] sm:$0xf]
    %v891 = vld [vmem:[#allocation2 + $0x2c] sm:$0xf]
    %v892 = vld [vmem:[#allocation2 + $0x30] sm:$0xf]
    %v893 = vld [vmem:[#allocation2 + $0x34] sm:$0xf]
    %v894 = vld [vmem:[#allocation2 + $0x38] sm:$0xf]
    %v895 = vld [vmem:[#allocation2 + $0x3c] sm:$0xf]
    %v897 = vlaneseq
    %v898 = vshrl.u32 %v897, 7
    %v899 = vsub.s32 0, %v898
    %v900 = vrot.slane %v879, %v899
    %v918 = vunpack.c.l.b16 %v880
    %v919 = vunpack.c.l.b16 %v881
    %v920 = vunpack.c.l.b16 %v882
    %v921 = vunpack.c.l.b16 %v883
    %v922 = vunpack.c.l.b16 %v884
    %v923 = vunpack.c.l.b16 %v885
    %v924 = vunpack.c.l.b16 %v886
    %v925 = vunpack.c.l.b16 %v887
    %v926 = vunpack.c.l.b16 %v888
    %v927 = vunpack.c.l.b16 %v889
    %v928 = vunpack.c.l.b16 %v890
    %v929 = vunpack.c.l.b16 %v891
    %v930 = vunpack.c.l.b16 %v892
    %v931 = vunpack.c.l.b16 %v893
    %v932 = vunpack.c.l.b16 %v894
    %v933 = vunpack.c.l.b16 %v895
    %v934 = vpack.c.b16 %v919, %v918
    %v935 = vpack.c.b16 %v921, %v920
    %v936 = vpack.c.b16 %v923, %v922
    %v937 = vpack.c.b16 %v925, %v924
    %v938 = vpack.c.b16 %v927, %v926
    %v939 = vpack.c.b16 %v929, %v928
    %v940 = vpack.c.b16 %v931, %v930
    %v941 = vpack.c.b16 %v933, %v932
    %v966 = vunpack.c.l.b16 %v847
    %v967 = vunpack.c.l.b16 %v848
    %v968 = vunpack.c.l.b16 %v849
    %v969 = vunpack.c.l.b16 %v850
    %v970 = vunpack.c.l.b16 %v851
    %v971 = vunpack.c.l.b16 %v852
    %v972 = vunpack.c.l.b16 %v853
    %v973 = vunpack.c.l.b16 %v854
    %v974 = vunpack.c.l.b16 %v855
    %v975 = vunpack.c.l.b16 %v856
    %v976 = vunpack.c.l.b16 %v857
    %v977 = vunpack.c.l.b16 %v858
    %v978 = vunpack.c.l.b16 %v859
    %v979 = vunpack.c.l.b16 %v860
    %v980 = vunpack.c.l.b16 %v861
    %v981 = vunpack.c.l.b16 %v862
    %v982 = vpack.c.b16 %v967, %v966
    %v983 = vpack.c.b16 %v969, %v968
    %v984 = vpack.c.b16 %v971, %v970
    %v985 = vpack.c.b16 %v973, %v972
    %v986 = vpack.c.b16 %v975, %v974
    %v987 = vpack.c.b16 %v977, %v976
    %v988 = vpack.c.b16 %v979, %v978
    %v989 = vpack.c.b16 %v981, %v980
    %998 = vmatprep.subr.bf16.mxu0 0
    %999 = vmatpush1.bf16.msra.mxu0 %v989
    %1000 = vmatprep.subr.bf16.mxu0 0
    %1001 = vmatpush1.bf16.msra.mxu0 %v988
    %1002 = vmatprep.subr.bf16.mxu0 0
    %1003 = vmatpush1.bf16.msra.mxu0 %v987
    %1004 = vmatprep.subr.bf16.mxu0 0
    %1005 = vmatpush1.bf16.msra.mxu0 %v986
    %1006 = vmatprep.subr.bf16.mxu0 0
    %1007 = vmatpush1.bf16.msra.mxu0 %v985
    %1008 = vmatprep.subr.bf16.mxu0 0
    %1009 = vmatpush1.bf16.msra.mxu0 %v984
    %1010 = vmatprep.subr.bf16.mxu0 0
    %1011 = vmatpush1.bf16.msra.mxu0 %v983
    %1012 = vmatprep.subr.bf16.mxu0 0
    %1013 = vmatpush1.bf16.msra.mxu0 %v982
    %1014 = vmatprep.subr.bf16.mxu0 0
    %1015 = vmatpush2.bf16.msra.mxu0 0
    %1016 = vmatprep.subr.bf16.mxu0 0
    %1017 = vmatpush2.bf16.msra.mxu0 0
    %1018 = vmatprep.subr.bf16.mxu0 0
    %1019 = vmatpush2.bf16.msra.mxu0 0
    %1020 = vmatprep.subr.bf16.mxu0 0
    %1021 = vmatpush2.bf16.msra.mxu0 0
    %1022 = vmatprep.subr.bf16.mxu0 0
    %1023 = vmatpush2.bf16.msra.mxu0 0
    %1024 = vmatprep.subr.bf16.mxu0 0
    %1025 = vmatpush2.bf16.msra.mxu0 0
    %1026 = vmatprep.subr.bf16.mxu0 0
    %1027 = vmatpush2.bf16.msra.mxu0 0
    %1028 = vmatprep.subr.bf16.mxu0 0
    %1029 = vmatpush2.bf16.msra.mxu0 0
    %1030 = vmatprep.mubr.bf16.mxu0 0
    %1031 = vmatmul.mubr.bf16.gmra.mxu0 %v934
    %v1032 = vpop.f32.mrf.mxu0
    %v1033 = vadd.f32 %v900, %v1032
    %v1034 = vpop.f32.mrf.mxu0
    %v1035 = vpop.f32.mrf.mxu0
    %v1036 = vadd.f32 %v900, %v1035
    %v1037 = vpop.f32.mrf.mxu0
    %1038 = vmatprep.mubr.bf16.mxu0 0
    %1039 = vmatmul.mubr.bf16.gmra.mxu0 %v935
    %v1040 = vpop.f32.mrf.mxu0
    %v1041 = vadd.f32 %v900, %v1040
    %v1042 = vpop.f32.mrf.mxu0
    %v1043 = vpop.f32.mrf.mxu0
    %v1044 = vadd.f32 %v900, %v1043
    %v1045 = vpop.f32.mrf.mxu0
    %1046 = vmatprep.mubr.bf16.mxu0 0
    %1047 = vmatmul.mubr.bf16.gmra.mxu0 %v936
    %v1048 = vpop.f32.mrf.mxu0
    %v1049 = vadd.f32 %v900, %v1048
    %v1050 = vpop.f32.mrf.mxu0
    %v1051 = vpop.f32.mrf.mxu0
    %v1052 = vadd.f32 %v900, %v1051
    %v1053 = vpop.f32.mrf.mxu0
    %1054 = vmatprep.mubr.bf16.mxu0 0
    %1055 = vmatmul.mubr.bf16.gmra.mxu0 %v937
    %v1056 = vpop.f32.mrf.mxu0
    %v1057 = vadd.f32 %v900, %v1056
    %v1058 = vpop.f32.mrf.mxu0
    %v1059 = vpop.f32.mrf.mxu0
    %v1060 = vadd.f32 %v900, %v1059
    %v1061 = vpop.f32.mrf.mxu0
    %1062 = vmatprep.mubr.bf16.mxu0 0
    %1063 = vmatmul.mubr.bf16.gmra.mxu0 %v938
    %v1064 = vpop.f32.mrf.mxu0
    %v1065 = vadd.f32 %v900, %v1064
    %v1066 = vpop.f32.mrf.mxu0
    %v1067 = vpop.f32.mrf.mxu0
    %v1068 = vadd.f32 %v900, %v1067
    %v1069 = vpop.f32.mrf.mxu0
    %1070 = vmatprep.mubr.bf16.mxu0 0
    %1071 = vmatmul.mubr.bf16.gmra.mxu0 %v939
    %v1072 = vpop.f32.mrf.mxu0
    %v1073 = vadd.f32 %v900, %v1072
    %v1074 = vpop.f32.mrf.mxu0
    %v1075 = vpop.f32.mrf.mxu0
    %v1076 = vadd.f32 %v900, %v1075
    %v1077 = vpop.f32.mrf.mxu0
    %1078 = vmatprep.mubr.bf16.mxu0 0
    %1079 = vmatmul.mubr.bf16.gmra.mxu0 %v940
    %v1080 = vpop.f32.mrf.mxu0
    %v1081 = vadd.f32 %v900, %v1080
    %v1082 = vpop.f32.mrf.mxu0
    %v1083 = vpop.f32.mrf.mxu0
    %v1084 = vadd.f32 %v900, %v1083
    %v1085 = vpop.f32.mrf.mxu0
    %1086 = vmatprep.mubr.bf16.mxu0 0
    %1087 = vmatmul.mubr.bf16.gmra.mxu0 %v941
    %v1088 = vpop.f32.mrf.mxu0
    %v1089 = vadd.f32 %v900, %v1088
    %v1090 = vpop.f32.mrf.mxu0
    %v1091 = vpop.f32.mrf.mxu0
    %v1092 = vadd.f32 %v900, %v1091
    %v1093 = vpop.f32.mrf.mxu0
    %1094 = vdwg.mxu0
    %v1095 = vpack.c.bf16 %v1036, %v1033
    %v1096 = vpack.c.bf16 %v1044, %v1041
    %v1097 = vpack.c.bf16 %v1052, %v1049
    %v1098 = vpack.c.bf16 %v1060, %v1057
    %v1099 = vpack.c.bf16 %v1068, %v1065
    %v1100 = vpack.c.bf16 %v1076, %v1073
    %v1101 = vpack.c.bf16 %v1084, %v1081
    %v1102 = vpack.c.bf16 %v1092, %v1089
    %v1111 = vunpack.c.l.b16 %v1095
    %v1112 = vunpack.c.h.b16 %v1095
    %v1113 = vunpack.c.l.b16 %v1096
    %v1114 = vunpack.c.h.b16 %v1096
    %v1115 = vunpack.c.l.b16 %v1097
    %v1116 = vunpack.c.h.b16 %v1097
    %v1117 = vunpack.c.l.b16 %v1098
    %v1118 = vunpack.c.h.b16 %v1098
    %v1119 = vunpack.c.l.b16 %v1099
    %v1120 = vunpack.c.h.b16 %v1099
    %v1121 = vunpack.c.l.b16 %v1100
    %v1122 = vunpack.c.h.b16 %v1100
    %v1123 = vunpack.c.l.b16 %v1101
    %v1124 = vunpack.c.h.b16 %v1101
    %v1125 = vunpack.c.l.b16 %v1102
    %v1126 = vunpack.c.h.b16 %v1102
    %v1127 = vpack.c.b16 %v1111, %v1111
    %v1128 = vpack.c.b16 %v1112, %v1112
    %v1129 = vpack.c.b16 %v1113, %v1113
    %v1130 = vpack.c.b16 %v1114, %v1114
    %v1131 = vpack.c.b16 %v1115, %v1115
    %v1132 = vpack.c.b16 %v1116, %v1116
    %v1133 = vpack.c.b16 %v1117, %v1117
    %v1134 = vpack.c.b16 %v1118, %v1118
    %v1135 = vpack.c.b16 %v1119, %v1119
    %v1136 = vpack.c.b16 %v1120, %v1120
    %v1137 = vpack.c.b16 %v1121, %v1121
    %v1138 = vpack.c.b16 %v1122, %v1122
    %v1139 = vpack.c.b16 %v1123, %v1123
    %v1140 = vpack.c.b16 %v1124, %v1124
    %v1141 = vpack.c.b16 %v1125, %v1125
    %v1142 = vpack.c.b16 %v1126, %v1126
    %1159 = vst [vmem:[#allocation2] sm:$0xf] %v1127
    %1160 = vst [vmem:[#allocation2 + $0x4] sm:$0xf] %v1128
    %1161 = vst [vmem:[#allocation2 + $0x8] sm:$0xf] %v1129
    %1162 = vst [vmem:[#allocation2 + $0xc] sm:$0xf] %v1130
    %1163 = vst [vmem:[#allocation2 + $0x10] sm:$0xf] %v1131
    %1164 = vst [vmem:[#allocation2 + $0x14] sm:$0xf] %v1132
    %1165 = vst [vmem:[#allocation2 + $0x18] sm:$0xf] %v1133
    %1166 = vst [vmem:[#allocation2 + $0x1c] sm:$0xf] %v1134
    %1167 = vst [vmem:[#allocation2 + $0x20] sm:$0xf] %v1135
    %1168 = vst [vmem:[#allocation2 + $0x24] sm:$0xf] %v1136
    %1169 = vst [vmem:[#allocation2 + $0x28] sm:$0xf] %v1137
    %1170 = vst [vmem:[#allocation2 + $0x2c] sm:$0xf] %v1138
    %1171 = vst [vmem:[#allocation2 + $0x30] sm:$0xf] %v1139
    %1172 = vst [vmem:[#allocation2 + $0x34] sm:$0xf] %v1140
    %1173 = vst [vmem:[#allocation2 + $0x38] sm:$0xf] %v1141
    %1174 = vst [vmem:[#allocation2 + $0x3c] sm:$0xf] %v1142
    %v1175 = vld [vmem:[#allocation2] sm:$0xf]
    %v1176 = vld [vmem:[#allocation2 + $0x4] sm:$0xf]
    %v1177 = vunpack.c.l.bf16 %v1175
    %v1178 = vunpack.c.l.bf16 %v1176
    %v1179 = vtanh.pop %v1177
    %v1180 = vtanh.pop %v1178
    %v1181 = vpack.c.bf16 %v1180, %v1179
    %v1182 = vld [vmem:[%s379] sm:$0xf]
    %v1183 = vld [vmem:[%s379 + $0x4] sm:$0xf]
    %v1184 = vunpack.c.l.bf16 %v1182
    %v1185 = vunpack.c.l.bf16 %v1183
    %v1202 = vunpack.c.l.b16 %v863
    %v1203 = vunpack.c.l.b16 %v864
    %v1204 = vunpack.c.l.b16 %v865
    %v1205 = vunpack.c.l.b16 %v866
    %v1206 = vunpack.c.l.b16 %v867
    %v1207 = vunpack.c.l.b16 %v868
    %v1208 = vunpack.c.l.b16 %v869
    %v1209 = vunpack.c.l.b16 %v870
    %v1210 = vunpack.c.l.b16 %v871
    %v1211 = vunpack.c.l.b16 %v872
    %v1212 = vunpack.c.l.b16 %v873
    %v1213 = vunpack.c.l.b16 %v874
    %v1214 = vunpack.c.l.b16 %v875
    %v1215 = vunpack.c.l.b16 %v876
    %v1216 = vunpack.c.l.b16 %v877
    %v1217 = vunpack.c.l.b16 %v878
    %v1218 = vpack.c.b16 %v1203, %v1202
    %v1219 = vpack.c.b16 %v1205, %v1204
    %v1220 = vpack.c.b16 %v1207, %v1206
    %v1221 = vpack.c.b16 %v1209, %v1208
    %v1222 = vpack.c.b16 %v1211, %v1210
    %v1223 = vpack.c.b16 %v1213, %v1212
    %v1224 = vpack.c.b16 %v1215, %v1214
    %v1225 = vpack.c.b16 %v1217, %v1216
    %1234 = vmatprep.subr.bf16.mxu0 0
    %1235 = vmatpush1.bf16.msra.mxu0 %v1225
    %1236 = vmatprep.subr.bf16.mxu0 0
    %1237 = vmatpush1.bf16.msra.mxu0 %v1224
    %1238 = vmatprep.subr.bf16.mxu0 0
    %1239 = vmatpush1.bf16.msra.mxu0 %v1223
    %1240 = vmatprep.subr.bf16.mxu0 0
    %1241 = vmatpush1.bf16.msra.mxu0 %v1222
    %1242 = vmatprep.subr.bf16.mxu0 0
    %1243 = vmatpush1.bf16.msra.mxu0 %v1221
    %1244 = vmatprep.subr.bf16.mxu0 0
    %1245 = vmatpush1.bf16.msra.mxu0 %v1220
    %1246 = vmatprep.subr.bf16.mxu0 0
    %1247 = vmatpush1.bf16.msra.mxu0 %v1219
    %1248 = vmatprep.subr.bf16.mxu0 0
    %1249 = vmatpush1.bf16.msra.mxu0 %v1218
    %1250 = vmatprep.subr.bf16.mxu0 0
    %1251 = vmatpush2.bf16.msra.mxu0 0
    %1252 = vmatprep.subr.bf16.mxu0 0
    %1253 = vmatpush2.bf16.msra.mxu0 0
    %1254 = vmatprep.subr.bf16.mxu0 0
    %1255 = vmatpush2.bf16.msra.mxu0 0
    %1256 = vmatprep.subr.bf16.mxu0 0
    %1257 = vmatpush2.bf16.msra.mxu0 0
    %1258 = vmatprep.subr.bf16.mxu0 0
    %1259 = vmatpush2.bf16.msra.mxu0 0
    %1260 = vmatprep.subr.bf16.mxu0 0
    %1261 = vmatpush2.bf16.msra.mxu0 0
    %1262 = vmatprep.subr.bf16.mxu0 0
    %1263 = vmatpush2.bf16.msra.mxu0 0
    %1264 = vmatprep.subr.bf16.mxu0 0
    %1265 = vmatpush2.bf16.msra.mxu0 0
    %1266 = vmatprep.mubr.bf16.mxu0 0
    %1267 = vmatmul.mubr.bf16.gmra.mxu0 %v1181
    %v1268 = vpop.f32.mrf.mxu0
    %v1269 = vadd.f32 0.0, %v1268
    %v1270 = vpop.f32.mrf.mxu0
    %v1271 = vpop.f32.mrf.mxu0
    %v1272 = vadd.f32 0.0, %v1271
    %v1273 = vpop.f32.mrf.mxu0
    %1274 = vdwg.mxu0
    %v1275 = vadd.f32 %v1184, %v1269
    %v1276 = vadd.f32 %v1185, %v1272
    %v1277 = vtanh.pop %v1275
    %v1278 = vtanh.pop %v1276
    %v1279 = vpack.c.bf16 %v1278, %v1277
    %v1280 = vld [vmem:[%s487] sm:$0xf]
    %v1281 = vld [vmem:[%s487 + $0x4] sm:$0xf]
    %v1282 = vunpack.c.l.bf16 %v1280
    %v1283 = vunpack.c.l.bf16 %v1281
    %1284 = vmatprep.subr.bf16.mxu0 0
    %1285 = vmatpush1.bf16.msra.mxu0 %v1225
    %1286 = vmatprep.subr.bf16.mxu0 0
    %1287 = vmatpush1.bf16.msra.mxu0 %v1224
    %1288 = vmatprep.subr.bf16.mxu0 0
    %1289 = vmatpush1.bf16.msra.mxu0 %v1223
    %1290 = vmatprep.subr.bf16.mxu0 0
    %1291 = vmatpush1.bf16.msra.mxu0 %v1222
    %1292 = vmatprep.subr.bf16.mxu0 0
    %1293 = vmatpush1.bf16.msra.mxu0 %v1221
    %1294 = vmatprep.subr.bf16.mxu0 0
    %1295 = vmatpush1.bf16.msra.mxu0 %v1220
    %1296 = vmatprep.subr.bf16.mxu0 0
    %1297 = vmatpush1.bf16.msra.mxu0 %v1219
    %1298 = vmatprep.subr.bf16.mxu0 0
    %1299 = vmatpush1.bf16.msra.mxu0 %v1218
    %1300 = vmatprep.subr.bf16.mxu0 0
    %1301 = vmatpush2.bf16.msra.mxu0 0
    %1302 = vmatprep.subr.bf16.mxu0 0
    %1303 = vmatpush2.bf16.msra.mxu0 0
    %1304 = vmatprep.subr.bf16.mxu0 0
    %1305 = vmatpush2.bf16.msra.mxu0 0
    %1306 = vmatprep.subr.bf16.mxu0 0
    %1307 = vmatpush2.bf16.msra.mxu0 0
    %1308 = vmatprep.subr.bf16.mxu0 0
    %1309 = vmatpush2.bf16.msra.mxu0 0
    %1310 = vmatprep.subr.bf16.mxu0 0
    %1311 = vmatpush2.bf16.msra.mxu0 0
    %1312 = vmatprep.subr.bf16.mxu0 0
    %1313 = vmatpush2.bf16.msra.mxu0 0
    %1314 = vmatprep.subr.bf16.mxu0 0
    %1315 = vmatpush2.bf16.msra.mxu0 0
    %1316 = vmatprep.mubr.bf16.mxu0 0
    %1317 = vmatmul.mubr.bf16.gmra.mxu0 %v1279
    %v1318 = vpop.f32.mrf.mxu0
    %v1319 = vadd.f32 0.0, %v1318
    %v1320 = vpop.f32.mrf.mxu0
    %v1321 = vpop.f32.mrf.mxu0
    %v1322 = vadd.f32 0.0, %v1321
    %v1323 = vpop.f32.mrf.mxu0
    %1324 = vdwg.mxu0
    %v1325 = vadd.f32 %v1282, %v1319
    %v1326 = vadd.f32 %v1283, %v1322
    %v1327 = vtanh.pop %v1325
    %v1328 = vtanh.pop %v1326
    %v1329 = vpack.c.bf16 %v1328, %v1327
    %v1330 = vld [vmem:[%s547] sm:$0xf]
    %v1331 = vld [vmem:[%s547 + $0x4] sm:$0xf]
    %v1332 = vunpack.c.l.bf16 %v1330
    %v1333 = vunpack.c.l.bf16 %v1331
    %1334 = vmatprep.subr.bf16.mxu0 0
    %1335 = vmatpush1.bf16.msra.mxu0 %v1225
    %1336 = vmatprep.subr.bf16.mxu0 0
    %1337 = vmatpush1.bf16.msra.mxu0 %v1224
    %1338 = vmatprep.subr.bf16.mxu0 0
    %1339 = vmatpush1.bf16.msra.mxu0 %v1223
    %1340 = vmatprep.subr.bf16.mxu0 0
    %1341 = vmatpush1.bf16.msra.mxu0 %v1222
    %1342 = vmatprep.subr.bf16.mxu0 0
    %1343 = vmatpush1.bf16.msra.mxu0 %v1221
    %1344 = vmatprep.subr.bf16.mxu0 0
    %1345 = vmatpush1.bf16.msra.mxu0 %v1220
    %1346 = vmatprep.subr.bf16.mxu0 0
    %1347 = vmatpush1.bf16.msra.mxu0 %v1219
    %1348 = vmatprep.subr.bf16.mxu0 0
    %1349 = vmatpush1.bf16.msra.mxu0 %v1218
    %1350 = vmatprep.subr.bf16.mxu0 0
    %1351 = vmatpush2.bf16.msra.mxu0 0
    %1352 = vmatprep.subr.bf16.mxu0 0
    %1353 = vmatpush2.bf16.msra.mxu0 0
    %1354 = vmatprep.subr.bf16.mxu0 0
    %1355 = vmatpush2.bf16.msra.mxu0 0
    %1356 = vmatprep.subr.bf16.mxu0 0
    %1357 = vmatpush2.bf16.msra.mxu0 0
    %1358 = vmatprep.subr.bf16.mxu0 0
    %1359 = vmatpush2.bf16.msra.mxu0 0
    %1360 = vmatprep.subr.bf16.mxu0 0
    %1361 = vmatpush2.bf16.msra.mxu0 0
    %1362 = vmatprep.subr.bf16.mxu0 0
    %1363 = vmatpush2.bf16.msra.mxu0 0
    %1364 = vmatprep.subr.bf16.mxu0 0
    %1365 = vmatpush2.bf16.msra.mxu0 0
    %1366 = vmatprep.mubr.bf16.mxu0 0
    %1367 = vmatmul.mubr.bf16.gmra.mxu0 %v1329
    %v1368 = vpop.f32.mrf.mxu0
    %v1369 = vadd.f32 0.0, %v1368
    %v1370 = vpop.f32.mrf.mxu0
    %v1371 = vpop.f32.mrf.mxu0
    %v1372 = vadd.f32 0.0, %v1371
    %v1373 = vpop.f32.mrf.mxu0
    %1374 = vdwg.mxu0
    %v1375 = vadd.f32 %v1332, %v1369
    %v1376 = vadd.f32 %v1333, %v1372
    %v1377 = vtanh.pop %v1375
    %v1378 = vtanh.pop %v1376
    %v1379 = vpack.c.bf16 %v1378, %v1377
    %v1380 = vld [vmem:[%s607] sm:$0xf]
    %v1381 = vld [vmem:[%s607 + $0x4] sm:$0xf]
    %v1382 = vunpack.c.l.bf16 %v1380
    %v1383 = vunpack.c.l.bf16 %v1381
    %1384 = vmatprep.subr.bf16.mxu0 0
    %1385 = vmatpush1.bf16.msra.mxu0 %v1225
    %1386 = vmatprep.subr.bf16.mxu0 0
    %1387 = vmatpush1.bf16.msra.mxu0 %v1224
    %1388 = vmatprep.subr.bf16.mxu0 0
    %1389 = vmatpush1.bf16.msra.mxu0 %v1223
    %1390 = vmatprep.subr.bf16.mxu0 0
    %1391 = vmatpush1.bf16.msra.mxu0 %v1222
    %1392 = vmatprep.subr.bf16.mxu0 0
    %1393 = vmatpush1.bf16.msra.mxu0 %v1221
    %1394 = vmatprep.subr.bf16.mxu0 0
    %1395 = vmatpush1.bf16.msra.mxu0 %v1220
    %1396 = vmatprep.subr.bf16.mxu0 0
    %1397 = vmatpush1.bf16.msra.mxu0 %v1219
    %1398 = vmatprep.subr.bf16.mxu0 0
    %1399 = vmatpush1.bf16.msra.mxu0 %v1218
    %1400 = vmatprep.subr.bf16.mxu0 0
    %1401 = vmatpush2.bf16.msra.mxu0 0
    %1402 = vmatprep.subr.bf16.mxu0 0
    %1403 = vmatpush2.bf16.msra.mxu0 0
    %1404 = vmatprep.subr.bf16.mxu0 0
    %1405 = vmatpush2.bf16.msra.mxu0 0
    %1406 = vmatprep.subr.bf16.mxu0 0
    %1407 = vmatpush2.bf16.msra.mxu0 0
    %1408 = vmatprep.subr.bf16.mxu0 0
    %1409 = vmatpush2.bf16.msra.mxu0 0
    %1410 = vmatprep.subr.bf16.mxu0 0
    %1411 = vmatpush2.bf16.msra.mxu0 0
    %1412 = vmatprep.subr.bf16.mxu0 0
    %1413 = vmatpush2.bf16.msra.mxu0 0
    %1414 = vmatprep.subr.bf16.mxu0 0
    %1415 = vmatpush2.bf16.msra.mxu0 0
    %1416 = vmatprep.mubr.bf16.mxu0 0
    %1417 = vmatmul.mubr.bf16.gmra.mxu0 %v1379
    %v1418 = vpop.f32.mrf.mxu0
    %v1419 = vadd.f32 0.0, %v1418
    %v1420 = vpop.f32.mrf.mxu0
    %v1421 = vpop.f32.mrf.mxu0
    %v1422 = vadd.f32 0.0, %v1421
    %v1423 = vpop.f32.mrf.mxu0
    %1424 = vdwg.mxu0
    %v1425 = vadd.f32 %v1382, %v1419
    %v1426 = vadd.f32 %v1383, %v1422
    %v1427 = vtanh.pop %v1425
    %v1428 = vtanh.pop %v1426
    %v1429 = vpack.c.bf16 %v1428, %v1427
    %v1430 = vld [vmem:[%s667] sm:$0xf]
    %v1431 = vld [vmem:[%s667 + $0x4] sm:$0xf]
    %v1432 = vunpack.c.l.bf16 %v1430
    %v1433 = vunpack.c.l.bf16 %v1431
    %1434 = vmatprep.subr.bf16.mxu0 0
    %1435 = vmatpush1.bf16.msra.mxu0 %v1225
    %1436 = vmatprep.subr.bf16.mxu0 0
    %1437 = vmatpush1.bf16.msra.mxu0 %v1224
    %1438 = vmatprep.subr.bf16.mxu0 0
    %1439 = vmatpush1.bf16.msra.mxu0 %v1223
    %1440 = vmatprep.subr.bf16.mxu0 0
    %1441 = vmatpush1.bf16.msra.mxu0 %v1222
    %1442 = vmatprep.subr.bf16.mxu0 0
    %1443 = vmatpush1.bf16.msra.mxu0 %v1221
    %1444 = vmatprep.subr.bf16.mxu0 0
    %1445 = vmatpush1.bf16.msra.mxu0 %v1220
    %1446 = vmatprep.subr.bf16.mxu0 0
    %1447 = vmatpush1.bf16.msra.mxu0 %v1219
    %1448 = vmatprep.subr.bf16.mxu0 0
    %1449 = vmatpush1.bf16.msra.mxu0 %v1218
    %1450 = vmatprep.subr.bf16.mxu0 0
    %1451 = vmatpush2.bf16.msra.mxu0 0
    %1452 = vmatprep.subr.bf16.mxu0 0
    %1453 = vmatpush2.bf16.msra.mxu0 0
    %1454 = vmatprep.subr.bf16.mxu0 0
    %1455 = vmatpush2.bf16.msra.mxu0 0
    %1456 = vmatprep.subr.bf16.mxu0 0
    %1457 = vmatpush2.bf16.msra.mxu0 0
    %1458 = vmatprep.subr.bf16.mxu0 0
    %1459 = vmatpush2.bf16.msra.mxu0 0
    %1460 = vmatprep.subr.bf16.mxu0 0
    %1461 = vmatpush2.bf16.msra.mxu0 0
    %1462 = vmatprep.subr.bf16.mxu0 0
    %1463 = vmatpush2.bf16.msra.mxu0 0
    %1464 = vmatprep.subr.bf16.mxu0 0
    %1465 = vmatpush2.bf16.msra.mxu0 0
    %1466 = vmatprep.mubr.bf16.mxu0 0
    %1467 = vmatmul.mubr.bf16.gmra.mxu0 %v1429
    %v1468 = vpop.f32.mrf.mxu0
    %v1469 = vadd.f32 0.0, %v1468
    %v1470 = vpop.f32.mrf.mxu0
    %v1471 = vpop.f32.mrf.mxu0
    %v1472 = vadd.f32 0.0, %v1471
    %v1473 = vpop.f32.mrf.mxu0
    %1474 = vdwg.mxu0
    %v1475 = vadd.f32 %v1432, %v1469
    %v1476 = vadd.f32 %v1433, %v1472
    %v1477 = vtanh.pop %v1475
    %v1478 = vtanh.pop %v1476
    %v1479 = vpack.c.bf16 %v1478, %v1477
    %v1480 = vld [vmem:[%s727] sm:$0xf]
    %v1481 = vld [vmem:[%s727 + $0x4] sm:$0xf]
    %v1482 = vunpack.c.l.bf16 %v1480
    %v1483 = vunpack.c.l.bf16 %v1481
    %1484 = vmatprep.subr.bf16.mxu0 0
    %1485 = vmatpush1.bf16.msra.mxu0 %v1225
    %1486 = vmatprep.subr.bf16.mxu0 0
    %1487 = vmatpush1.bf16.msra.mxu0 %v1224
    %1488 = vmatprep.subr.bf16.mxu0 0
    %1489 = vmatpush1.bf16.msra.mxu0 %v1223
    %1490 = vmatprep.subr.bf16.mxu0 0
    %1491 = vmatpush1.bf16.msra.mxu0 %v1222
    %1492 = vmatprep.subr.bf16.mxu0 0
    %1493 = vmatpush1.bf16.msra.mxu0 %v1221
    %1494 = vmatprep.subr.bf16.mxu0 0
    %1495 = vmatpush1.bf16.msra.mxu0 %v1220
    %1496 = vmatprep.subr.bf16.mxu0 0
    %1497 = vmatpush1.bf16.msra.mxu0 %v1219
    %1498 = vmatprep.subr.bf16.mxu0 0
    %1499 = vmatpush1.bf16.msra.mxu0 %v1218
    %1500 = vmatprep.subr.bf16.mxu0 0
    %1501 = vmatpush2.bf16.msra.mxu0 0
    %1502 = vmatprep.subr.bf16.mxu0 0
    %1503 = vmatpush2.bf16.msra.mxu0 0
    %1504 = vmatprep.subr.bf16.mxu0 0
    %1505 = vmatpush2.bf16.msra.mxu0 0
    %1506 = vmatprep.subr.bf16.mxu0 0
    %1507 = vmatpush2.bf16.msra.mxu0 0
    %1508 = vmatprep.subr.bf16.mxu0 0
    %1509 = vmatpush2.bf16.msra.mxu0 0
    %1510 = vmatprep.subr.bf16.mxu0 0
    %1511 = vmatpush2.bf16.msra.mxu0 0
    %1512 = vmatprep.subr.bf16.mxu0 0
    %1513 = vmatpush2.bf16.msra.mxu0 0
    %1514 = vmatprep.subr.bf16.mxu0 0
    %1515 = vmatpush2.bf16.msra.mxu0 0
    %1516 = vmatprep.mubr.bf16.mxu0 0
    %1517 = vmatmul.mubr.bf16.gmra.mxu0 %v1479
    %v1518 = vpop.f32.mrf.mxu0
    %v1519 = vadd.f32 0.0, %v1518
    %v1520 = vpop.f32.mrf.mxu0
    %v1521 = vpop.f32.mrf.mxu0
    %v1522 = vadd.f32 0.0, %v1521
    %v1523 = vpop.f32.mrf.mxu0
    %1524 = vdwg.mxu0
    %v1525 = vadd.f32 %v1482, %v1519
    %v1526 = vadd.f32 %v1483, %v1522
    %v1527 = vtanh.pop %v1525
    %v1528 = vtanh.pop %v1526
    %v1529 = vpack.c.bf16 %v1528, %v1527
    %v1530 = vld [vmem:[%s787] sm:$0xf]
    %v1531 = vld [vmem:[%s787 + $0x4] sm:$0xf]
    %v1532 = vunpack.c.l.bf16 %v1530
    %v1533 = vunpack.c.l.bf16 %v1531
    %1534 = vmatprep.subr.bf16.mxu0 0
    %1535 = vmatpush1.bf16.msra.mxu0 %v1225
    %1536 = vmatprep.subr.bf16.mxu0 0
    %1537 = vmatpush1.bf16.msra.mxu0 %v1224
    %1538 = vmatprep.subr.bf16.mxu0 0
    %1539 = vmatpush1.bf16.msra.mxu0 %v1223
    %1540 = vmatprep.subr.bf16.mxu0 0
    %1541 = vmatpush1.bf16.msra.mxu0 %v1222
    %1542 = vmatprep.subr.bf16.mxu0 0
    %1543 = vmatpush1.bf16.msra.mxu0 %v1221
    %1544 = vmatprep.subr.bf16.mxu0 0
    %1545 = vmatpush1.bf16.msra.mxu0 %v1220
    %1546 = vmatprep.subr.bf16.mxu0 0
    %1547 = vmatpush1.bf16.msra.mxu0 %v1219
    %1548 = vmatprep.subr.bf16.mxu0 0
    %1549 = vmatpush1.bf16.msra.mxu0 %v1218
    %1550 = vmatprep.subr.bf16.mxu0 0
    %1551 = vmatpush2.bf16.msra.mxu0 0
    %1552 = vmatprep.subr.bf16.mxu0 0
    %1553 = vmatpush2.bf16.msra.mxu0 0
    %1554 = vmatprep.subr.bf16.mxu0 0
    %1555 = vmatpush2.bf16.msra.mxu0 0
    %1556 = vmatprep.subr.bf16.mxu0 0
    %1557 = vmatpush2.bf16.msra.mxu0 0
    %1558 = vmatprep.subr.bf16.mxu0 0
    %1559 = vmatpush2.bf16.msra.mxu0 0
    %1560 = vmatprep.subr.bf16.mxu0 0
    %1561 = vmatpush2.bf16.msra.mxu0 0
    %1562 = vmatprep.subr.bf16.mxu0 0
    %1563 = vmatpush2.bf16.msra.mxu0 0
    %1564 = vmatprep.subr.bf16.mxu0 0
    %1565 = vmatpush2.bf16.msra.mxu0 0
    %1566 = vmatprep.mubr.bf16.mxu0 0
    %1567 = vmatmul.mubr.bf16.gmra.mxu0 %v1529
    %v1568 = vpop.f32.mrf.mxu0
    %v1569 = vadd.f32 0.0, %v1568
    %v1570 = vpop.f32.mrf.mxu0
    %v1571 = vpop.f32.mrf.mxu0
    %v1572 = vadd.f32 0.0, %v1571
    %v1573 = vpop.f32.mrf.mxu0
    %1574 = vdwg.mxu0
    %v1575 = vadd.f32 %v1532, %v1569
    %v1576 = vadd.f32 %v1533, %v1572
    %v1577 = vtanh.pop %v1575
    %v1578 = vtanh.pop %v1576
    %v1579 = vpack.c.bf16 %v1578, %v1577
    %v1580 = vld [vmem:[#allocation7] sm:$0xf]
    %v1581 = vld [vmem:[#allocation7 + $0x4] sm:$0xf]
    %v1582 = vld [vmem:[#allocation7 + $0x8] sm:$0xf]
    %v1583 = vld [vmem:[#allocation7 + $0xc] sm:$0xf]
    %v1584 = vld [vmem:[#allocation7 + $0x10] sm:$0xf]
    %v1585 = vld [vmem:[#allocation7 + $0x14] sm:$0xf]
    %v1586 = vld [vmem:[#allocation7 + $0x18] sm:$0xf]
    %v1587 = vld [vmem:[#allocation7 + $0x1c] sm:$0xf]
    %v1588 = vld [vmem:[#allocation7 + $0x20] sm:$0xf]
    %v1589 = vld [vmem:[#allocation7 + $0x24] sm:$0xf]
    %v1590 = vld [vmem:[#allocation7 + $0x28] sm:$0xf]
    %v1591 = vld [vmem:[#allocation7 + $0x2c] sm:$0xf]
    %v1592 = vld [vmem:[#allocation7 + $0x30] sm:$0xf]
    %v1593 = vld [vmem:[#allocation7 + $0x34] sm:$0xf]
    %v1594 = vld [vmem:[#allocation7 + $0x38] sm:$0xf]
    %v1595 = vld [vmem:[#allocation7 + $0x3c] sm:$0xf]
    %v1596 = vld [vmem:[%s8] sm:$0x1]
    %v1598 = vlaneseq
    %v1599 = vshrl.u32 %v1598, 7
    %v1600 = vsub.s32 0, %v1599
    %v1601 = vrot.slane %v1596, %v1600
    %v1619 = vunpack.c.l.b16 %v1580
    %v1620 = vunpack.c.l.b16 %v1581
    %v1621 = vunpack.c.l.b16 %v1582
    %v1622 = vunpack.c.l.b16 %v1583
    %v1623 = vunpack.c.l.b16 %v1584
    %v1624 = vunpack.c.l.b16 %v1585
    %v1625 = vunpack.c.l.b16 %v1586
    %v1626 = vunpack.c.l.b16 %v1587
    %v1627 = vunpack.c.l.b16 %v1588
    %v1628 = vunpack.c.l.b16 %v1589
    %v1629 = vunpack.c.l.b16 %v1590
    %v1630 = vunpack.c.l.b16 %v1591
    %v1631 = vunpack.c.l.b16 %v1592
    %v1632 = vunpack.c.l.b16 %v1593
    %v1633 = vunpack.c.l.b16 %v1594
    %v1634 = vunpack.c.l.b16 %v1595
    %v1635 = vpack.c.b16 %v1620, %v1619
    %v1636 = vpack.c.b16 %v1622, %v1621
    %v1637 = vpack.c.b16 %v1624, %v1623
    %v1638 = vpack.c.b16 %v1626, %v1625
    %v1639 = vpack.c.b16 %v1628, %v1627
    %v1640 = vpack.c.b16 %v1630, %v1629
    %v1641 = vpack.c.b16 %v1632, %v1631
    %v1642 = vpack.c.b16 %v1634, %v1633
    %1651 = vmatprep.subr.bf16.mxu0 0
    %1652 = vmatpush1.bf16.msra.mxu0 %v1642
    %1653 = vmatprep.subr.bf16.mxu0 0
    %1654 = vmatpush1.bf16.msra.mxu0 %v1641
    %1655 = vmatprep.subr.bf16.mxu0 0
    %1656 = vmatpush1.bf16.msra.mxu0 %v1640
    %1657 = vmatprep.subr.bf16.mxu0 0
    %1658 = vmatpush1.bf16.msra.mxu0 %v1639
    %1659 = vmatprep.subr.bf16.mxu0 0
    %1660 = vmatpush1.bf16.msra.mxu0 %v1638
    %1661 = vmatprep.subr.bf16.mxu0 0
    %1662 = vmatpush1.bf16.msra.mxu0 %v1637
    %1663 = vmatprep.subr.bf16.mxu0 0
    %1664 = vmatpush1.bf16.msra.mxu0 %v1636
    %1665 = vmatprep.subr.bf16.mxu0 0
    %1666 = vmatpush1.bf16.msra.mxu0 %v1635
    %1667 = vmatprep.subr.bf16.mxu0 0
    %1668 = vmatpush2.bf16.msra.mxu0 0
    %1669 = vmatprep.subr.bf16.mxu0 0
    %1670 = vmatpush2.bf16.msra.mxu0 0
    %1671 = vmatprep.subr.bf16.mxu0 0
    %1672 = vmatpush2.bf16.msra.mxu0 0
    %1673 = vmatprep.subr.bf16.mxu0 0
    %1674 = vmatpush2.bf16.msra.mxu0 0
    %1675 = vmatprep.subr.bf16.mxu0 0
    %1676 = vmatpush2.bf16.msra.mxu0 0
    %1677 = vmatprep.subr.bf16.mxu0 0
    %1678 = vmatpush2.bf16.msra.mxu0 0
    %1679 = vmatprep.subr.bf16.mxu0 0
    %1680 = vmatpush2.bf16.msra.mxu0 0
    %1681 = vmatprep.subr.bf16.mxu0 0
    %1682 = vmatpush2.bf16.msra.mxu0 0
    %1683 = vmatprep.mubr.bf16.mxu0 0
    %1684 = vmatmul.mubr.bf16.gmra.mxu0 %v1579
    %v1685 = vpop.f32.mrf.mxu0
    %v1686 = vadd.f32 %v1601, %v1685
    %v1687 = vpop.f32.mrf.mxu0
    %v1688 = vpop.f32.mrf.mxu0
    %v1689 = vadd.f32 %v1601, %v1688
    %v1690 = vpop.f32.mrf.mxu0
    %1691 = vdwg.mxu0
    %1692 = vst [vmem:[%s9] sm:$0xff] %v1686
    %1693 = vst [vmem:[%s9 + $0x8] sm:$0xff] %v1689
    // Predicated region
    $region50: #{rnn_model_forward.1} parent=1 // pred_check
      _
    $region51: #{rnn_model_forward.1} parent=1 // pred_check_branch
      %1695 = sbr.rel (0) target = $region53
    $region52: #{rnn_model_forward.1} parent=1 // pred_region
      _
    $region53: #{rnn_model_forward.1} parent=1 // pred_fallthru
      _
    // Predicated region
    $region54: #{rnn_model_forward.1} parent=1 // pred_check
      _
    $region55: #{rnn_model_forward.1} parent=1 // pred_check_branch
      %1697 = sbr.rel (0) target = $region57
    $region56: #{rnn_model_forward.1} parent=1 // pred_region
      _
    $region57: #{rnn_model_forward.1} parent=1 // pred_fallthru
      _
    %1698 = vsyncpa [#allocation4], 1
    %1699 = vsyncpa [#allocation6], 1

</llo_original>
